<compile_context>
chip_gen: v7x
topology: tpu7x:2x2x1
jax: 0.10.0
libtpu: 0.0.40
codegen_flags: <defaults>
</compile_context>

<pallas_src>
import jax
import jax.numpy as jnp
from jax.experimental import pallas as pl
from jax.experimental.pallas import tpu as pltpu

DEGREE = 2
K_TAPS = DEGREE + 1          # polynomial taps k = 0..degree
HIDDEN = 64
N_NODES = 3                  # 3-D moments -> 3x3 covariance "graph"
ALPHA = 0.2                  # LeakyReLU negative slope
NUM_POINTS = 4               # s2_delta_mixture with 4 delta points
OUTPUT_DIM = NUM_POINTS * 4  # num_points*3 coords + num_points weights
NORM_EPS = 1e-12             # F.normalize eps
NEG_BIG = -1e30              # softmax mask fill (exp underflows to 0)


def vnn_kernel(m2_ref, m1_ref,
               h1_ref, b1_ref, h2_ref, b2_ref, h3_ref, b3_ref,
               wout_ref, bout_ref, g_ref, out_ref):
    """Everything VMEM-resident; batch (padded to a multiple of 8) on sublanes.

    m2_ref  : (Bp, 9)   row-major flattened 3x3 second moments
    m1_ref  : (Bp, 3)   first moments (in_channels = 1 per node)
    h1_ref  : (K, HIDDEN)          layer-1 taps (Cin = 1)
    h2/h3   : (K, HIDDEN, HIDDEN)  per-tap weight matrices
    b*_ref  : (1, HIDDEN)
    wout_ref: (HIDDEN, OUTPUT_DIM), bout_ref: (1, OUTPUT_DIM)
    g_ref   : (OUTPUT_DIM, OUTPUT_DIM) constant 0/1 group matrix (3-pt groups)
    out_ref : (Bp, OUTPUT_DIM)     [normalized points | softmax weights]
    """
    Bp = out_ref.shape[0]
    f32 = jnp.float32

    # ---- hoisted loads & hoisted lane broadcasts (each done exactly once) ----
    a_col = [[m2_ref[:, (3 * i + j):(3 * i + j + 1)] for j in range(N_NODES)]
             for i in range(N_NODES)]                           # (Bp, 1)
    a_bc = [[jnp.broadcast_to(a_col[i][j], (Bp, HIDDEN)) for j in range(N_NODES)]
            for i in range(N_NODES)]                            # (Bp, HIDDEN)
    h1 = [h1_ref[k:k + 1, :] for k in range(K_TAPS)]            # (1, HIDDEN)
    b1 = b1_ref[...]
    wout = wout_ref[...]
    bout = bout_ref[...]
    G = g_ref[...]

    def leaky_relu(v):
        return jnp.where(v > 0, v, ALPHA * v)

    def apply_m2_cols(cols):   # (Bp, 1) columns (layer 1, Cin = 1)
        return [a_col[i][0] * cols[0] + a_col[i][1] * cols[1] + a_col[i][2] * cols[2]
                for i in range(N_NODES)]

    def apply_m2(slabs):       # (Bp, HIDDEN) slabs, pre-broadcast covariance
        return [a_bc[i][0] * slabs[0] + a_bc[i][1] * slabs[1] + a_bc[i][2] * slabs[2]
                for i in range(N_NODES)]

    # ---- layer 1 (Cin = 1): pure VPU outer products ----
    p0 = [m1_ref[:, i:i + 1] for i in range(N_NODES)]           # (Bp, 1)
    p1 = apply_m2_cols(p0)                                      # M2   x
    p2 = apply_m2_cols(p1)                                      # M2^2 x
    x = [leaky_relu(p0[i] * h1[0] + p1[i] * h1[1] + p2[i] * h1[2] + b1)
         for i in range(N_NODES)]                               # (Bp, HIDDEN)

    # ---- layers 2 & 3: three accumulated (3*Bp,64)@(64,64) MXU matmuls ----
    for h_ref, bias_ref in ((h2_ref, b2_ref), (h3_ref, b3_ref)):
        p0 = x
        p1 = apply_m2(p0)
        p2 = apply_m2(p1)
        # node-major sublane stacks (Bp % 8 == 0 -> aligned, cheap)
        s = [jnp.concatenate(pk, axis=0) for pk in (p0, p1, p2)]   # (3*Bp, HIDDEN)
        z = (jnp.dot(s[0], h_ref[0], preferred_element_type=f32)
             + jnp.dot(s[1], h_ref[1], preferred_element_type=f32)
             + jnp.dot(s[2], h_ref[2], preferred_element_type=f32))
        z = z + bias_ref[...]                                      # one broadcast add
        x = [leaky_relu(z[i * Bp:(i + 1) * Bp, :]) for i in range(N_NODES)]

    # ---- mean pool over nodes + fc_out (kept as a value; no scratch) ----
    pooled = (x[0] + x[1] + x[2]) * (1.0 / N_NODES)             # (Bp, HIDDEN)
    head = jnp.dot(pooled, wout, preferred_element_type=f32) + bout   # (Bp, OUTPUT_DIM)

    # ---- fused s2_delta_mixture head (slice-free, lane-dense) ----
    # per-3-point-group sum of squares via one tiny 0/1 group matmul
    ss = jnp.dot(head * head, G, preferred_element_type=f32)    # (Bp, OUTPUT_DIM)
    inv_norm = jax.lax.rsqrt(jnp.maximum(ss, NORM_EPS * NORM_EPS))   # EUP
    pts = head * inv_norm    # valid on point columns; weight columns masked below

    col = jax.lax.broadcasted_iota(jnp.int32, (Bp, OUTPUT_DIM), 1)
    wmask = col >= NUM_POINTS * 3                               # weight columns
    masked = jnp.where(wmask, head, NEG_BIG)
    wmax = jnp.max(masked, axis=1, keepdims=True)
    wexp = jnp.exp(masked - wmax)                               # point cols -> 0
    denom = jnp.sum(wexp, axis=1, keepdims=True)
    inv_d = pl.reciprocal(denom, approx=True)                   # EUP
    inv_d = inv_d * (2.0 - denom * inv_d)                       # Newton: full f32
    w_soft = wexp * inv_d

    # single lane-dense store
    out_ref[...] = jnp.where(wmask, w_soft, pts)


def init_params(key):
    """Deterministic synthetic parameters (PyTorch-Linear-style uniform init)."""
    ks = jax.random.split(key, 8)

    def u(k, shape, fan_in):
        bound = 1.0 / float(fan_in) ** 0.5
        return jax.random.uniform(k, shape, jnp.float32, -bound, bound)

    return {
        'h1': u(ks[0], (K_TAPS, 1, HIDDEN), 1),
        'b1': u(ks[1], (1, HIDDEN), 1),
        'h2': u(ks[2], (K_TAPS, HIDDEN, HIDDEN), HIDDEN),
        'b2': u(ks[3], (1, HIDDEN), HIDDEN),
        'h3': u(ks[4], (K_TAPS, HIDDEN, HIDDEN), HIDDEN),
        'b3': u(ks[5], (1, HIDDEN), HIDDEN),
        'wout': u(ks[6], (HIDDEN, OUTPUT_DIM), HIDDEN),
        'bout': u(ks[7], (1, OUTPUT_DIM), HIDDEN),
    }


@jax.jit
def vnn_forward(M2, M1, params):
    B = M2.shape[0]
    Bp = ((B + 7) // 8) * 8                                     # whole sublane tiles

    m2_flat = jnp.pad(M2.reshape(B, N_NODES * N_NODES).astype(jnp.float32),
                      ((0, Bp - B), (0, 0)))
    m1 = jnp.pad(M1.astype(jnp.float32), ((0, Bp - B), (0, 0)))

    h1 = params['h1'].reshape(K_TAPS, HIDDEN)                   # Cin = 1
    h2 = params['h2']                                           # (K, H, H)
    h3 = params['h3']

    # constant 0/1 group matrix: column c sums the squared entries of the
    # 3-lane point group containing c (0 on the weight columns).  Folded to a
    # compile-time constant under jit.
    G = jnp.zeros((OUTPUT_DIM, OUTPUT_DIM), jnp.float32)
    for p in range(NUM_POINTS):
        G = G.at[3 * p:3 * p + 3, 3 * p:3 * p + 3].set(1.0)

    vmem = pl.BlockSpec(memory_space=pltpu.MemorySpace.VMEM)
    out = pl.pallas_call(
        vnn_kernel,
        out_shape=jax.ShapeDtypeStruct((Bp, OUTPUT_DIM), jnp.float32),
        in_specs=[vmem] * 11,
        out_specs=vmem,
        # total resident data (~150 KiB weights + a few KiB activations) is
        # orders of magnitude under VMEM on v5e/v6e/v7x: no grid, no blocking.
    )(m2_flat, m1, h1, params['b1'], h2, params['b2'], h3, params['b3'],
      params['wout'], params['bout'], G)

    out = out[:B]
    s2_points = out[:, :NUM_POINTS * 3].reshape(B, NUM_POINTS, 3)
    s2_weights = out[:, NUM_POINTS * 3:]
    return {'s2_points': s2_points, 's2_weights': s2_weights}


def vnn_reference(M2, M1, params):
    """Pure-JAX reference using the eigh-based spectral form (validation only)."""
    B = M2.shape[0]
    lam, V = jnp.linalg.eigh(M2.astype(jnp.float32))            # (B,3), (B,3,3)
    x = M1[..., None].astype(jnp.float32)                       # (B,3,1)
    for name in ('1', '2', '3'):
        h, b = params['h' + name], params['b' + name]
        xhat = jnp.einsum('bji,bjc->bic', V, x)                 # V^T x
        acc = sum(((lam[..., None] ** k) * xhat) @ h[k] for k in range(K_TAPS))
        z = jnp.einsum('bij,bjc->bic', V, acc) + b
        x = jnp.where(z > 0, z, ALPHA * z)
    pooled = jnp.mean(x, axis=1)
    out = pooled @ params['wout'] + params['bout']
    pts = out[:, :NUM_POINTS * 3].reshape(B, NUM_POINTS, 3)
    nrm = jnp.maximum(jnp.linalg.norm(pts, axis=2, keepdims=True), NORM_EPS)
    return {'s2_points': pts / nrm,
            's2_weights': jax.nn.softmax(out[:, NUM_POINTS * 3:], axis=1)}


if __name__ == "__main__":
    key = jax.random.PRNGKey(0)
    kp, ka, km = jax.random.split(key, 3)

    B, N = 4, 3                                                 # 3-D moments
    A = jax.random.normal(ka, (B, N, N), jnp.float32)
    M2 = jnp.einsum('bij,bkj->bik', A, A) / N                   # symmetric PSD second moment
    M1 = jax.random.normal(km, (B, N), jnp.float32)             # first moment

    params = init_params(kp)
    result = vnn_forward(M2, M1, params)
    jax.block_until_ready(result)

    assert result['s2_points'].shape == (B, NUM_POINTS, 3)
    assert result['s2_weights'].shape == (B, NUM_POINTS)
    assert bool(jnp.all(jnp.isfinite(result['s2_points'])))
    assert bool(jnp.all(jnp.isfinite(result['s2_weights'])))

    ref = vnn_reference(M2, M1, params)
    # all-f32 path vs eigh reference: typical agreement ~1e-6; 1e-3 leaves
    # headroom for ill-conditioned spectra while still catching layout bugs.
    assert bool(jnp.allclose(result['s2_points'], ref['s2_points'],
                             atol=1e-3, rtol=1e-3))
    assert bool(jnp.allclose(result['s2_weights'], ref['s2_weights'],
                             atol=1e-3, rtol=1e-3))
    print("KERNEL_OK")
</pallas_src>

<mosaic_0001>
module attributes {stable_mosaic.version = 11 : i64} {
  func.func @vnn_kernel(%arg0: memref<8x9xf32, #tpu.memory_space<vmem>>, %arg1: memref<8x3xf32, #tpu.memory_space<vmem>>, %arg2: memref<3x64xf32, #tpu.memory_space<vmem>>, %arg3: memref<1x64xf32, #tpu.memory_space<vmem>>, %arg4: memref<3x64x64xf32, #tpu.memory_space<vmem>>, %arg5: memref<1x64xf32, #tpu.memory_space<vmem>>, %arg6: memref<3x64x64xf32, #tpu.memory_space<vmem>>, %arg7: memref<1x64xf32, #tpu.memory_space<vmem>>, %arg8: memref<64x16xf32, #tpu.memory_space<vmem>>, %arg9: memref<1x16xf32, #tpu.memory_space<vmem>>, %arg10: memref<16x16xf32, #tpu.memory_space<vmem>>, %arg11: memref<8x16xf32, #tpu.memory_space<vmem>>) attributes {dimension_semantics = [], scalar_prefetch = 0 : i64, scratch_operands = 0 : i64, tpu.core_type = #tpu.core_type<tc>} {
    %c0 = arith.constant 0 : index
    %c0_0 = arith.constant 0 : index
    %0 = vector.load %arg0[%c0, %c0_0] : memref<8x9xf32, #tpu.memory_space<vmem>>, vector<8x1xf32>
    %c0_1 = arith.constant 0 : index
    %c1 = arith.constant 1 : index
    %1 = vector.load %arg0[%c0_1, %c1] : memref<8x9xf32, #tpu.memory_space<vmem>>, vector<8x1xf32>
    %c0_2 = arith.constant 0 : index
    %c2 = arith.constant 2 : index
    %2 = vector.load %arg0[%c0_2, %c2] : memref<8x9xf32, #tpu.memory_space<vmem>>, vector<8x1xf32>
    %c0_3 = arith.constant 0 : index
    %c3 = arith.constant 3 : index
    %3 = vector.load %arg0[%c0_3, %c3] : memref<8x9xf32, #tpu.memory_space<vmem>>, vector<8x1xf32>
    %c0_4 = arith.constant 0 : index
    %c4 = arith.constant 4 : index
    %4 = vector.load %arg0[%c0_4, %c4] : memref<8x9xf32, #tpu.memory_space<vmem>>, vector<8x1xf32>
    %c0_5 = arith.constant 0 : index
    %c5 = arith.constant 5 : index
    %5 = vector.load %arg0[%c0_5, %c5] : memref<8x9xf32, #tpu.memory_space<vmem>>, vector<8x1xf32>
    %c0_6 = arith.constant 0 : index
    %c6 = arith.constant 6 : index
    %6 = vector.load %arg0[%c0_6, %c6] : memref<8x9xf32, #tpu.memory_space<vmem>>, vector<8x1xf32>
    %c0_7 = arith.constant 0 : index
    %c7 = arith.constant 7 : index
    %7 = vector.load %arg0[%c0_7, %c7] : memref<8x9xf32, #tpu.memory_space<vmem>>, vector<8x1xf32>
    %c0_8 = arith.constant 0 : index
    %c8 = arith.constant 8 : index
    %8 = vector.load %arg0[%c0_8, %c8] : memref<8x9xf32, #tpu.memory_space<vmem>>, vector<8x1xf32>
    %9 = vector.shape_cast %0 : vector<8x1xf32> to vector<8x1xf32>
    %10 = vector.broadcast %9 : vector<8x1xf32> to vector<8x64xf32>
    %11 = vector.shape_cast %1 : vector<8x1xf32> to vector<8x1xf32>
    %12 = vector.broadcast %11 : vector<8x1xf32> to vector<8x64xf32>
    %13 = vector.shape_cast %2 : vector<8x1xf32> to vector<8x1xf32>
    %14 = vector.broadcast %13 : vector<8x1xf32> to vector<8x64xf32>
    %15 = vector.shape_cast %3 : vector<8x1xf32> to vector<8x1xf32>
    %16 = vector.broadcast %15 : vector<8x1xf32> to vector<8x64xf32>
    %17 = vector.shape_cast %4 : vector<8x1xf32> to vector<8x1xf32>
    %18 = vector.broadcast %17 : vector<8x1xf32> to vector<8x64xf32>
    %19 = vector.shape_cast %5 : vector<8x1xf32> to vector<8x1xf32>
    %20 = vector.broadcast %19 : vector<8x1xf32> to vector<8x64xf32>
    %21 = vector.shape_cast %6 : vector<8x1xf32> to vector<8x1xf32>
    %22 = vector.broadcast %21 : vector<8x1xf32> to vector<8x64xf32>
    %23 = vector.shape_cast %7 : vector<8x1xf32> to vector<8x1xf32>
    %24 = vector.broadcast %23 : vector<8x1xf32> to vector<8x64xf32>
    %25 = vector.shape_cast %8 : vector<8x1xf32> to vector<8x1xf32>
    %26 = vector.broadcast %25 : vector<8x1xf32> to vector<8x64xf32>
    %c0_9 = arith.constant 0 : index
    %c0_10 = arith.constant 0 : index
    %27 = vector.load %arg2[%c0_9, %c0_10] : memref<3x64xf32, #tpu.memory_space<vmem>>, vector<1x64xf32>
    %c1_11 = arith.constant 1 : index
    %c0_12 = arith.constant 0 : index
    %28 = vector.load %arg2[%c1_11, %c0_12] : memref<3x64xf32, #tpu.memory_space<vmem>>, vector<1x64xf32>
    %c2_13 = arith.constant 2 : index
    %c0_14 = arith.constant 0 : index
    %29 = vector.load %arg2[%c2_13, %c0_14] : memref<3x64xf32, #tpu.memory_space<vmem>>, vector<1x64xf32>
    %c0_15 = arith.constant 0 : index
    %c0_16 = arith.constant 0 : index
    %30 = vector.load %arg3[%c0_15, %c0_16] : memref<1x64xf32, #tpu.memory_space<vmem>>, vector<1x64xf32>
    %c0_17 = arith.constant 0 : index
    %c0_18 = arith.constant 0 : index
    %31 = vector.load %arg8[%c0_17, %c0_18] : memref<64x16xf32, #tpu.memory_space<vmem>>, vector<64x16xf32>
    %c0_19 = arith.constant 0 : index
    %c0_20 = arith.constant 0 : index
    %32 = vector.load %arg9[%c0_19, %c0_20] : memref<1x16xf32, #tpu.memory_space<vmem>>, vector<1x16xf32>
    %c0_21 = arith.constant 0 : index
    %c0_22 = arith.constant 0 : index
    %33 = vector.load %arg10[%c0_21, %c0_22] : memref<16x16xf32, #tpu.memory_space<vmem>>, vector<16x16xf32>
    %c0_23 = arith.constant 0 : index
    %c0_24 = arith.constant 0 : index
    %34 = vector.load %arg1[%c0_23, %c0_24] : memref<8x3xf32, #tpu.memory_space<vmem>>, vector<8x1xf32>
    %c0_25 = arith.constant 0 : index
    %c1_26 = arith.constant 1 : index
    %35 = vector.load %arg1[%c0_25, %c1_26] : memref<8x3xf32, #tpu.memory_space<vmem>>, vector<8x1xf32>
    %c0_27 = arith.constant 0 : index
    %c2_28 = arith.constant 2 : index
    %36 = vector.load %arg1[%c0_27, %c2_28] : memref<8x3xf32, #tpu.memory_space<vmem>>, vector<8x1xf32>
    %37 = arith.mulf %0, %34 : vector<8x1xf32>
    %38 = arith.mulf %1, %35 : vector<8x1xf32>
    %39 = arith.addf %37, %38 : vector<8x1xf32>
    %40 = arith.mulf %2, %36 : vector<8x1xf32>
    %41 = arith.addf %39, %40 : vector<8x1xf32>
    %42 = arith.mulf %3, %34 : vector<8x1xf32>
    %43 = arith.mulf %4, %35 : vector<8x1xf32>
    %44 = arith.addf %42, %43 : vector<8x1xf32>
    %45 = arith.mulf %5, %36 : vector<8x1xf32>
    %46 = arith.addf %44, %45 : vector<8x1xf32>
    %47 = arith.mulf %6, %34 : vector<8x1xf32>
    %48 = arith.mulf %7, %35 : vector<8x1xf32>
    %49 = arith.addf %47, %48 : vector<8x1xf32>
    %50 = arith.mulf %8, %36 : vector<8x1xf32>
    %51 = arith.addf %49, %50 : vector<8x1xf32>
    %52 = arith.mulf %0, %41 : vector<8x1xf32>
    %53 = arith.mulf %1, %46 : vector<8x1xf32>
    %54 = arith.addf %52, %53 : vector<8x1xf32>
    %55 = arith.mulf %2, %51 : vector<8x1xf32>
    %56 = arith.addf %54, %55 : vector<8x1xf32>
    %57 = arith.mulf %3, %41 : vector<8x1xf32>
    %58 = arith.mulf %4, %46 : vector<8x1xf32>
    %59 = arith.addf %57, %58 : vector<8x1xf32>
    %60 = arith.mulf %5, %51 : vector<8x1xf32>
    %61 = arith.addf %59, %60 : vector<8x1xf32>
    %62 = arith.mulf %6, %41 : vector<8x1xf32>
    %63 = arith.mulf %7, %46 : vector<8x1xf32>
    %64 = arith.addf %62, %63 : vector<8x1xf32>
    %65 = arith.mulf %8, %51 : vector<8x1xf32>
    %66 = arith.addf %64, %65 : vector<8x1xf32>
    %67 = vector.broadcast %34 : vector<8x1xf32> to vector<8x64xf32>
    %68 = vector.broadcast %27 : vector<1x64xf32> to vector<8x64xf32>
    %69 = arith.mulf %67, %68 : vector<8x64xf32>
    %70 = vector.broadcast %41 : vector<8x1xf32> to vector<8x64xf32>
    %71 = vector.broadcast %28 : vector<1x64xf32> to vector<8x64xf32>
    %72 = arith.mulf %70, %71 : vector<8x64xf32>
    %73 = arith.addf %69, %72 : vector<8x64xf32>
    %74 = vector.broadcast %56 : vector<8x1xf32> to vector<8x64xf32>
    %75 = vector.broadcast %29 : vector<1x64xf32> to vector<8x64xf32>
    %76 = arith.mulf %74, %75 : vector<8x64xf32>
    %77 = arith.addf %73, %76 : vector<8x64xf32>
    %78 = vector.broadcast %30 : vector<1x64xf32> to vector<8x64xf32>
    %79 = arith.addf %77, %78 : vector<8x64xf32>
    %cst = arith.constant 0.000000e+00 : f32
    %80 = vector.broadcast %cst : f32 to vector<8x64xf32>
    %81 = arith.cmpf ogt, %79, %80 : vector<8x64xf32>
    %cst_29 = arith.constant 2.000000e-01 : f32
    %82 = vector.broadcast %cst_29 : f32 to vector<8x64xf32>
    %83 = arith.mulf %82, %79 : vector<8x64xf32>
    %84 = arith.select %81, %79, %83 : vector<8x64xi1>, vector<8x64xf32>
    %85 = vector.broadcast %35 : vector<8x1xf32> to vector<8x64xf32>
    %86 = vector.broadcast %27 : vector<1x64xf32> to vector<8x64xf32>
    %87 = arith.mulf %85, %86 : vector<8x64xf32>
    %88 = vector.broadcast %46 : vector<8x1xf32> to vector<8x64xf32>
    %89 = vector.broadcast %28 : vector<1x64xf32> to vector<8x64xf32>
    %90 = arith.mulf %88, %89 : vector<8x64xf32>
    %91 = arith.addf %87, %90 : vector<8x64xf32>
    %92 = vector.broadcast %61 : vector<8x1xf32> to vector<8x64xf32>
    %93 = vector.broadcast %29 : vector<1x64xf32> to vector<8x64xf32>
    %94 = arith.mulf %92, %93 : vector<8x64xf32>
    %95 = arith.addf %91, %94 : vector<8x64xf32>
    %96 = vector.broadcast %30 : vector<1x64xf32> to vector<8x64xf32>
    %97 = arith.addf %95, %96 : vector<8x64xf32>
    %cst_30 = arith.constant 0.000000e+00 : f32
    %98 = vector.broadcast %cst_30 : f32 to vector<8x64xf32>
    %99 = arith.cmpf ogt, %97, %98 : vector<8x64xf32>
    %cst_31 = arith.constant 2.000000e-01 : f32
    %100 = vector.broadcast %cst_31 : f32 to vector<8x64xf32>
    %101 = arith.mulf %100, %97 : vector<8x64xf32>
    %102 = arith.select %99, %97, %101 : vector<8x64xi1>, vector<8x64xf32>
    %103 = vector.broadcast %36 : vector<8x1xf32> to vector<8x64xf32>
    %104 = vector.broadcast %27 : vector<1x64xf32> to vector<8x64xf32>
    %105 = arith.mulf %103, %104 : vector<8x64xf32>
    %106 = vector.broadcast %51 : vector<8x1xf32> to vector<8x64xf32>
    %107 = vector.broadcast %28 : vector<1x64xf32> to vector<8x64xf32>
    %108 = arith.mulf %106, %107 : vector<8x64xf32>
    %109 = arith.addf %105, %108 : vector<8x64xf32>
    %110 = vector.broadcast %66 : vector<8x1xf32> to vector<8x64xf32>
    %111 = vector.broadcast %29 : vector<1x64xf32> to vector<8x64xf32>
    %112 = arith.mulf %110, %111 : vector<8x64xf32>
    %113 = arith.addf %109, %112 : vector<8x64xf32>
    %114 = vector.broadcast %30 : vector<1x64xf32> to vector<8x64xf32>
    %115 = arith.addf %113, %114 : vector<8x64xf32>
    %cst_32 = arith.constant 0.000000e+00 : f32
    %116 = vector.broadcast %cst_32 : f32 to vector<8x64xf32>
    %117 = arith.cmpf ogt, %115, %116 : vector<8x64xf32>
    %cst_33 = arith.constant 2.000000e-01 : f32
    %118 = vector.broadcast %cst_33 : f32 to vector<8x64xf32>
    %119 = arith.mulf %118, %115 : vector<8x64xf32>
    %120 = arith.select %117, %115, %119 : vector<8x64xi1>, vector<8x64xf32>
    %121 = arith.mulf %10, %84 : vector<8x64xf32>
    %122 = arith.mulf %12, %102 : vector<8x64xf32>
    %123 = arith.addf %121, %122 : vector<8x64xf32>
    %124 = arith.mulf %14, %120 : vector<8x64xf32>
    %125 = arith.addf %123, %124 : vector<8x64xf32>
    %126 = arith.mulf %16, %84 : vector<8x64xf32>
    %127 = arith.mulf %18, %102 : vector<8x64xf32>
    %128 = arith.addf %126, %127 : vector<8x64xf32>
    %129 = arith.mulf %20, %120 : vector<8x64xf32>
    %130 = arith.addf %128, %129 : vector<8x64xf32>
    %131 = arith.mulf %22, %84 : vector<8x64xf32>
    %132 = arith.mulf %24, %102 : vector<8x64xf32>
    %133 = arith.addf %131, %132 : vector<8x64xf32>
    %134 = arith.mulf %26, %120 : vector<8x64xf32>
    %135 = arith.addf %133, %134 : vector<8x64xf32>
    %136 = arith.mulf %10, %125 : vector<8x64xf32>
    %137 = arith.mulf %12, %130 : vector<8x64xf32>
    %138 = arith.addf %136, %137 : vector<8x64xf32>
    %139 = arith.mulf %14, %135 : vector<8x64xf32>
    %140 = arith.addf %138, %139 : vector<8x64xf32>
    %141 = arith.mulf %16, %125 : vector<8x64xf32>
    %142 = arith.mulf %18, %130 : vector<8x64xf32>
    %143 = arith.addf %141, %142 : vector<8x64xf32>
    %144 = arith.mulf %20, %135 : vector<8x64xf32>
    %145 = arith.addf %143, %144 : vector<8x64xf32>
    %146 = arith.mulf %22, %125 : vector<8x64xf32>
    %147 = arith.mulf %24, %130 : vector<8x64xf32>
    %148 = arith.addf %146, %147 : vector<8x64xf32>
    %149 = arith.mulf %26, %135 : vector<8x64xf32>
    %150 = arith.addf %148, %149 : vector<8x64xf32>
    %151 = tpu.concatenate %84, %102, %120 in 0 : vector<8x64xf32>, vector<8x64xf32>, vector<8x64xf32> -> vector<24x64xf32>
    %152 = tpu.concatenate %125, %130, %135 in 0 : vector<8x64xf32>, vector<8x64xf32>, vector<8x64xf32> -> vector<24x64xf32>
    %153 = tpu.concatenate %140, %145, %150 in 0 : vector<8x64xf32>, vector<8x64xf32>, vector<8x64xf32> -> vector<24x64xf32>
    %c0_34 = arith.constant 0 : index
    %c0_35 = arith.constant 0 : index
    %c0_36 = arith.constant 0 : index
    %154 = vector.load %arg4[%c0_34, %c0_35, %c0_36] : memref<3x64x64xf32, #tpu.memory_space<vmem>>, vector<1x64x64xf32>
    %155 = vector.shape_cast %154 : vector<1x64x64xf32> to vector<64x64xf32>
    %cst_37 = arith.constant dense<0.000000e+00> : vector<24x64xf32>
    %156 = tpu.matmul %151, %155, %cst_37 {dimension_numbers = #tpu.dot_dimension_numbers<[1], [0], [0], [1], [0, 0, 1, 1], [], []>} : vector<24x64xf32>, vector<64x64xf32>, vector<24x64xf32> -> vector<24x64xf32>
    %c1_38 = arith.constant 1 : index
    %c0_39 = arith.constant 0 : index
    %c0_40 = arith.constant 0 : index
    %157 = vector.load %arg4[%c1_38, %c0_39, %c0_40] : memref<3x64x64xf32, #tpu.memory_space<vmem>>, vector<1x64x64xf32>
    %158 = vector.shape_cast %157 : vector<1x64x64xf32> to vector<64x64xf32>
    %cst_41 = arith.constant dense<0.000000e+00> : vector<24x64xf32>
    %159 = tpu.matmul %152, %158, %cst_41 {dimension_numbers = #tpu.dot_dimension_numbers<[1], [0], [0], [1], [0, 0, 1, 1], [], []>} : vector<24x64xf32>, vector<64x64xf32>, vector<24x64xf32> -> vector<24x64xf32>
    %160 = arith.addf %156, %159 : vector<24x64xf32>
    %c2_42 = arith.constant 2 : index
    %c0_43 = arith.constant 0 : index
    %c0_44 = arith.constant 0 : index
    %161 = vector.load %arg4[%c2_42, %c0_43, %c0_44] : memref<3x64x64xf32, #tpu.memory_space<vmem>>, vector<1x64x64xf32>
    %162 = vector.shape_cast %161 : vector<1x64x64xf32> to vector<64x64xf32>
    %cst_45 = arith.constant dense<0.000000e+00> : vector<24x64xf32>
    %163 = tpu.matmul %153, %162, %cst_45 {dimension_numbers = #tpu.dot_dimension_numbers<[1], [0], [0], [1], [0, 0, 1, 1], [], []>} : vector<24x64xf32>, vector<64x64xf32>, vector<24x64xf32> -> vector<24x64xf32>
    %164 = arith.addf %160, %163 : vector<24x64xf32>
    %c0_46 = arith.constant 0 : index
    %c0_47 = arith.constant 0 : index
    %165 = vector.load %arg5[%c0_46, %c0_47] : memref<1x64xf32, #tpu.memory_space<vmem>>, vector<1x64xf32>
    %166 = vector.broadcast %165 : vector<1x64xf32> to vector<24x64xf32>
    %167 = arith.addf %164, %166 : vector<24x64xf32>
    %168 = vector.extract_strided_slice %167 {offsets = [0, 0], sizes = [8, 64], strides = [1, 1]} : vector<24x64xf32> to vector<8x64xf32>
    %cst_48 = arith.constant 0.000000e+00 : f32
    %169 = vector.broadcast %cst_48 : f32 to vector<8x64xf32>
    %170 = arith.cmpf ogt, %168, %169 : vector<8x64xf32>
    %cst_49 = arith.constant 2.000000e-01 : f32
    %171 = vector.broadcast %cst_49 : f32 to vector<8x64xf32>
    %172 = arith.mulf %171, %168 : vector<8x64xf32>
    %173 = arith.select %170, %168, %172 : vector<8x64xi1>, vector<8x64xf32>
    %174 = vector.extract_strided_slice %167 {offsets = [8, 0], sizes = [8, 64], strides = [1, 1]} : vector<24x64xf32> to vector<8x64xf32>
    %cst_50 = arith.constant 0.000000e+00 : f32
    %175 = vector.broadcast %cst_50 : f32 to vector<8x64xf32>
    %176 = arith.cmpf ogt, %174, %175 : vector<8x64xf32>
    %cst_51 = arith.constant 2.000000e-01 : f32
    %177 = vector.broadcast %cst_51 : f32 to vector<8x64xf32>
    %178 = arith.mulf %177, %174 : vector<8x64xf32>
    %179 = arith.select %176, %174, %178 : vector<8x64xi1>, vector<8x64xf32>
    %180 = vector.extract_strided_slice %167 {offsets = [16, 0], sizes = [8, 64], strides = [1, 1]} : vector<24x64xf32> to vector<8x64xf32>
    %cst_52 = arith.constant 0.000000e+00 : f32
    %181 = vector.broadcast %cst_52 : f32 to vector<8x64xf32>
    %182 = arith.cmpf ogt, %180, %181 : vector<8x64xf32>
    %cst_53 = arith.constant 2.000000e-01 : f32
    %183 = vector.broadcast %cst_53 : f32 to vector<8x64xf32>
    %184 = arith.mulf %183, %180 : vector<8x64xf32>
    %185 = arith.select %182, %180, %184 : vector<8x64xi1>, vector<8x64xf32>
    %186 = arith.mulf %10, %173 : vector<8x64xf32>
    %187 = arith.mulf %12, %179 : vector<8x64xf32>
    %188 = arith.addf %186, %187 : vector<8x64xf32>
    %189 = arith.mulf %14, %185 : vector<8x64xf32>
    %190 = arith.addf %188, %189 : vector<8x64xf32>
    %191 = arith.mulf %16, %173 : vector<8x64xf32>
    %192 = arith.mulf %18, %179 : vector<8x64xf32>
    %193 = arith.addf %191, %192 : vector<8x64xf32>
    %194 = arith.mulf %20, %185 : vector<8x64xf32>
    %195 = arith.addf %193, %194 : vector<8x64xf32>
    %196 = arith.mulf %22, %173 : vector<8x64xf32>
    %197 = arith.mulf %24, %179 : vector<8x64xf32>
    %198 = arith.addf %196, %197 : vector<8x64xf32>
    %199 = arith.mulf %26, %185 : vector<8x64xf32>
    %200 = arith.addf %198, %199 : vector<8x64xf32>
    %201 = arith.mulf %10, %190 : vector<8x64xf32>
    %202 = arith.mulf %12, %195 : vector<8x64xf32>
    %203 = arith.addf %201, %202 : vector<8x64xf32>
    %204 = arith.mulf %14, %200 : vector<8x64xf32>
    %205 = arith.addf %203, %204 : vector<8x64xf32>
    %206 = arith.mulf %16, %190 : vector<8x64xf32>
    %207 = arith.mulf %18, %195 : vector<8x64xf32>
    %208 = arith.addf %206, %207 : vector<8x64xf32>
    %209 = arith.mulf %20, %200 : vector<8x64xf32>
    %210 = arith.addf %208, %209 : vector<8x64xf32>
    %211 = arith.mulf %22, %190 : vector<8x64xf32>
    %212 = arith.mulf %24, %195 : vector<8x64xf32>
    %213 = arith.addf %211, %212 : vector<8x64xf32>
    %214 = arith.mulf %26, %200 : vector<8x64xf32>
    %215 = arith.addf %213, %214 : vector<8x64xf32>
    %216 = tpu.concatenate %173, %179, %185 in 0 : vector<8x64xf32>, vector<8x64xf32>, vector<8x64xf32> -> vector<24x64xf32>
    %217 = tpu.concatenate %190, %195, %200 in 0 : vector<8x64xf32>, vector<8x64xf32>, vector<8x64xf32> -> vector<24x64xf32>
    %218 = tpu.concatenate %205, %210, %215 in 0 : vector<8x64xf32>, vector<8x64xf32>, vector<8x64xf32> -> vector<24x64xf32>
    %c0_54 = arith.constant 0 : index
    %c0_55 = arith.constant 0 : index
    %c0_56 = arith.constant 0 : index
    %219 = vector.load %arg6[%c0_54, %c0_55, %c0_56] : memref<3x64x64xf32, #tpu.memory_space<vmem>>, vector<1x64x64xf32>
    %220 = vector.shape_cast %219 : vector<1x64x64xf32> to vector<64x64xf32>
    %cst_57 = arith.constant dense<0.000000e+00> : vector<24x64xf32>
    %221 = tpu.matmul %216, %220, %cst_57 {dimension_numbers = #tpu.dot_dimension_numbers<[1], [0], [0], [1], [0, 0, 1, 1], [], []>} : vector<24x64xf32>, vector<64x64xf32>, vector<24x64xf32> -> vector<24x64xf32>
    %c1_58 = arith.constant 1 : index
    %c0_59 = arith.constant 0 : index
    %c0_60 = arith.constant 0 : index
    %222 = vector.load %arg6[%c1_58, %c0_59, %c0_60] : memref<3x64x64xf32, #tpu.memory_space<vmem>>, vector<1x64x64xf32>
    %223 = vector.shape_cast %222 : vector<1x64x64xf32> to vector<64x64xf32>
    %cst_61 = arith.constant dense<0.000000e+00> : vector<24x64xf32>
    %224 = tpu.matmul %217, %223, %cst_61 {dimension_numbers = #tpu.dot_dimension_numbers<[1], [0], [0], [1], [0, 0, 1, 1], [], []>} : vector<24x64xf32>, vector<64x64xf32>, vector<24x64xf32> -> vector<24x64xf32>
    %225 = arith.addf %221, %224 : vector<24x64xf32>
    %c2_62 = arith.constant 2 : index
    %c0_63 = arith.constant 0 : index
    %c0_64 = arith.constant 0 : index
    %226 = vector.load %arg6[%c2_62, %c0_63, %c0_64] : memref<3x64x64xf32, #tpu.memory_space<vmem>>, vector<1x64x64xf32>
    %227 = vector.shape_cast %226 : vector<1x64x64xf32> to vector<64x64xf32>
    %cst_65 = arith.constant dense<0.000000e+00> : vector<24x64xf32>
    %228 = tpu.matmul %218, %227, %cst_65 {dimension_numbers = #tpu.dot_dimension_numbers<[1], [0], [0], [1], [0, 0, 1, 1], [], []>} : vector<24x64xf32>, vector<64x64xf32>, vector<24x64xf32> -> vector<24x64xf32>
    %229 = arith.addf %225, %228 : vector<24x64xf32>
    %c0_66 = arith.constant 0 : index
    %c0_67 = arith.constant 0 : index
    %230 = vector.load %arg7[%c0_66, %c0_67] : memref<1x64xf32, #tpu.memory_space<vmem>>, vector<1x64xf32>
    %231 = vector.broadcast %230 : vector<1x64xf32> to vector<24x64xf32>
    %232 = arith.addf %229, %231 : vector<24x64xf32>
    %233 = vector.extract_strided_slice %232 {offsets = [0, 0], sizes = [8, 64], strides = [1, 1]} : vector<24x64xf32> to vector<8x64xf32>
    %cst_68 = arith.constant 0.000000e+00 : f32
    %234 = vector.broadcast %cst_68 : f32 to vector<8x64xf32>
    %235 = arith.cmpf ogt, %233, %234 : vector<8x64xf32>
    %cst_69 = arith.constant 2.000000e-01 : f32
    %236 = vector.broadcast %cst_69 : f32 to vector<8x64xf32>
    %237 = arith.mulf %236, %233 : vector<8x64xf32>
    %238 = arith.select %235, %233, %237 : vector<8x64xi1>, vector<8x64xf32>
    %239 = vector.extract_strided_slice %232 {offsets = [8, 0], sizes = [8, 64], strides = [1, 1]} : vector<24x64xf32> to vector<8x64xf32>
    %cst_70 = arith.constant 0.000000e+00 : f32
    %240 = vector.broadcast %cst_70 : f32 to vector<8x64xf32>
    %241 = arith.cmpf ogt, %239, %240 : vector<8x64xf32>
    %cst_71 = arith.constant 2.000000e-01 : f32
    %242 = vector.broadcast %cst_71 : f32 to vector<8x64xf32>
    %243 = arith.mulf %242, %239 : vector<8x64xf32>
    %244 = arith.select %241, %239, %243 : vector<8x64xi1>, vector<8x64xf32>
    %245 = vector.extract_strided_slice %232 {offsets = [16, 0], sizes = [8, 64], strides = [1, 1]} : vector<24x64xf32> to vector<8x64xf32>
    %cst_72 = arith.constant 0.000000e+00 : f32
    %246 = vector.broadcast %cst_72 : f32 to vector<8x64xf32>
    %247 = arith.cmpf ogt, %245, %246 : vector<8x64xf32>
    %cst_73 = arith.constant 2.000000e-01 : f32
    %248 = vector.broadcast %cst_73 : f32 to vector<8x64xf32>
    %249 = arith.mulf %248, %245 : vector<8x64xf32>
    %250 = arith.select %247, %245, %249 : vector<8x64xi1>, vector<8x64xf32>
    %251 = arith.addf %238, %244 : vector<8x64xf32>
    %252 = arith.addf %251, %250 : vector<8x64xf32>
    %cst_74 = arith.constant 0.333333343 : f32
    %253 = vector.broadcast %cst_74 : f32 to vector<8x64xf32>
    %254 = arith.mulf %252, %253 : vector<8x64xf32>
    %cst_75 = arith.constant dense<0.000000e+00> : vector<8x16xf32>
    %255 = tpu.matmul %254, %31, %cst_75 {dimension_numbers = #tpu.dot_dimension_numbers<[1], [0], [0], [1], [0, 0, 1, 1], [], []>} : vector<8x64xf32>, vector<64x16xf32>, vector<8x16xf32> -> vector<8x16xf32>
    %256 = vector.broadcast %32 : vector<1x16xf32> to vector<8x16xf32>
    %257 = arith.addf %255, %256 : vector<8x16xf32>
    %258 = arith.mulf %257, %257 : vector<8x16xf32>
    %cst_76 = arith.constant dense<0.000000e+00> : vector<8x16xf32>
    %259 = tpu.matmul %258, %33, %cst_76 {dimension_numbers = #tpu.dot_dimension_numbers<[1], [0], [0], [1], [0, 0, 1, 1], [], []>} : vector<8x16xf32>, vector<16x16xf32>, vector<8x16xf32> -> vector<8x16xf32>
    %cst_77 = arith.constant 1.000000e-24 : f32
    %260 = vector.broadcast %cst_77 : f32 to vector<8x16xf32>
    %261 = arith.maximumf %259, %260 : vector<8x16xf32>
    %262 = math.rsqrt %261 : vector<8x16xf32>
    %263 = arith.mulf %257, %262 : vector<8x16xf32>
    %264 = tpu.iota {dimensions = array<i32: 1>} : vector<8x16xi32>
    %c12_i32 = arith.constant 12 : i32
    %265 = vector.broadcast %c12_i32 : i32 to vector<8x16xi32>
    %266 = arith.cmpi sge, %264, %265 : vector<8x16xi32>
    %cst_78 = arith.constant -1.000000e+30 : f32
    %267 = vector.broadcast %cst_78 : f32 to vector<8x16xf32>
    %268 = arith.select %266, %257, %267 : vector<8x16xi1>, vector<8x16xf32>
    %cst_79 = arith.constant dense<0xFF800000> : vector<8xf32>
    %269 = vector.multi_reduction <maximumf>, %268, %cst_79 [1] : vector<8x16xf32> to vector<8xf32>
    %270 = vector.shape_cast %269 : vector<8xf32> to vector<8x1xf32>
    %271 = vector.broadcast %270 : vector<8x1xf32> to vector<8x16xf32>
    %272 = arith.subf %268, %271 : vector<8x16xf32>
    %273 = math.exp %272 : vector<8x16xf32>
    %cst_80 = arith.constant dense<0.000000e+00> : vector<8xf32>
    %274 = vector.multi_reduction <add>, %273, %cst_80 [1] : vector<8x16xf32> to vector<8xf32>
    %275 = vector.shape_cast %274 : vector<8xf32> to vector<8x1xf32>
    %276 = tpu.reciprocal %275 {approx = true} : vector<8x1xf32> -> vector<8x1xf32>
    %277 = arith.mulf %275, %276 : vector<8x1xf32>
    %cst_81 = arith.constant 2.000000e+00 : f32
    %278 = vector.broadcast %cst_81 : f32 to vector<8x1xf32>
    %279 = arith.subf %278, %277 : vector<8x1xf32>
    %280 = arith.mulf %276, %279 : vector<8x1xf32>
    %281 = vector.broadcast %280 : vector<8x1xf32> to vector<8x16xf32>
    %282 = arith.mulf %273, %281 : vector<8x16xf32>
    %283 = arith.select %266, %282, %263 : vector<8x16xi1>, vector<8x16xf32>
    %c0_82 = arith.constant 0 : index
    %c0_83 = arith.constant 0 : index
    %284 = vector.load %arg11[%c0_82, %c0_83] : memref<8x16xf32, #tpu.memory_space<vmem>>, vector<8x16xf32>
    tpu.vector_store %arg11[%c0_82, %c0_83], %283 {strides = array<i32>} : memref<8x16xf32, #tpu.memory_space<vmem>>, vector<8x16xf32>,
    return
  }
}

</mosaic_0001>

<llo_original>
// kernel: vnn_forward.1
$region0: #{vnn_forward.1}
  #allocation0 [shape = 'u32[]', space=smem, size = 0x4, offset = 0x4, fixed_abs, tag = 'smem constant byte address 0x4 - core index']
  #allocation1 [shape = 'u32[144,128]{1,0:T(1,128)}', space=vmem, size = 0x12000, scoped, tag = 'internal scratch']
  %s0 = inlined_call_operand.vmem [shape: f32[8,9], index: 0, kind: input, shape index: {}]
  %s1 = inlined_call_operand.vmem [shape: f32[8,3], index: 1, kind: input, shape index: {}]
  %s2 = inlined_call_operand.vmem [shape: f32[3,64], index: 2, kind: input, shape index: {}]
  %s3 = inlined_call_operand.vmem [shape: f32[1,64], index: 3, kind: input, shape index: {}]
  %s4 = inlined_call_operand.vmem [shape: f32[3,64,64], index: 4, kind: input, shape index: {}]
  %s5 = inlined_call_operand.vmem [shape: f32[1,64], index: 5, kind: input, shape index: {}]
  %s6 = inlined_call_operand.hbm [shape: f32[3,64,64], index: 6, kind: input, shape index: {}]
  %s7 = inlined_call_operand.vmem [shape: f32[1,64], index: 7, kind: input, shape index: {}]
  %s8 = inlined_call_operand.vmem [shape: f32[64,16], index: 8, kind: input, shape index: {}]
  %s9 = inlined_call_operand.vmem [shape: f32[1,16], index: 9, kind: input, shape index: {}]
  %s10 = inlined_call_operand.vmem [shape: f32[16,16], index: 10, kind: input, shape index: {}]
  %s11 = inlined_call_operand.vmem [shape: f32[8,16], index: 11, kind: output, shape index: {}]
  %s12 = sld [smem:[#allocation0]]
  $region58: #{vnn_forward.1} parent=0
    _
  %s14 = ssub.s32 1, %s12
  %s15 = scalar_select 0, %s14, %s12
  $region1: #{vnn_forward.1} parent=0
    #allocation2 [shape = 'u8[98304]{0}', space=vmem, size = 0x18000, scoped, tag = 'input window, operand 6, single buffered']
    #allocation3 [shape = 's32[1]{0}', space=sflag, size = 0x4, scoped, tag = 'scoped memory for vnn_forward.1']
    %16 = vsyncpa [#allocation3], 0
    // Predicated region
    $region2: #{vnn_forward.1} parent=1 // pred_check
      _
    $region3: #{vnn_forward.1} parent=1 // pred_check_branch
      %18 = sbr.rel (0) target = $region5
    $region4: #{vnn_forward.1} parent=1 // pred_region
      _
    $region5: #{vnn_forward.1} parent=1 // pred_fallthru
      _
    // Predicated region
    $region6: #{vnn_forward.1} parent=1 // pred_check
      _
    $region7: #{vnn_forward.1} parent=1 // pred_check_branch
      %20 = sbr.rel (0) target = $region9
    $region8: #{vnn_forward.1} parent=1 // pred_region
      _
    $region9: #{vnn_forward.1} parent=1 // pred_fallthru
      _
    // Predicated region
    $region10: #{vnn_forward.1} parent=1 // pred_check
      _
    $region11: #{vnn_forward.1} parent=1 // pred_check_branch
      %22 = sbr.rel (0) target = $region13
    $region12: #{vnn_forward.1} parent=1 // pred_region
      _
    $region13: #{vnn_forward.1} parent=1 // pred_fallthru
      _
    // Predicated region
    $region14: #{vnn_forward.1} parent=1 // pred_check
      _
    $region15: #{vnn_forward.1} parent=1 // pred_check_branch
      %24 = sbr.rel (0) target = $region17
    $region16: #{vnn_forward.1} parent=1 // pred_region
      _
    $region17: #{vnn_forward.1} parent=1 // pred_fallthru
      _
    // Predicated region
    $region18: #{vnn_forward.1} parent=1 // pred_check
      _
    $region19: #{vnn_forward.1} parent=1 // pred_check_branch
      %26 = sbr.rel (0) target = $region21
    $region20: #{vnn_forward.1} parent=1 // pred_region
      _
    $region21: #{vnn_forward.1} parent=1 // pred_fallthru
      _
    // Predicated region
    $region22: #{vnn_forward.1} parent=1 // pred_check
      _
    $region23: #{vnn_forward.1} parent=1 // pred_check_branch
      %28 = sbr.rel (0) target = $region25
    $region24: #{vnn_forward.1} parent=1 // pred_region
      _
    $region25: #{vnn_forward.1} parent=1 // pred_fallthru
      _
    // Predicated region
    $region26: #{vnn_forward.1} parent=1 // pred_check
      _
    $region27: #{vnn_forward.1} parent=1 // pred_check_branch
      %30 = sbr.rel (0) target = $region29
    $region28: #{vnn_forward.1} parent=1 // pred_region
      %s32 = ssub.s32 3072, 3072
      %33 = vsyncadd [#allocation3], %s32
      %s34 = sshll.u32 [#allocation2], 4
      %s35 = int_to_ptr.vmem [resolvable:$true] %s34
      %40 = dma.hbm_to_vmem [thread:$0]  %s6, 3072, %s35, [#allocation3], 128, 128, 8
    $region29: #{vnn_forward.1} parent=1 // pred_fallthru
      _
    // Predicated region
    $region30: #{vnn_forward.1} parent=1 // pred_check
      _
    $region31: #{vnn_forward.1} parent=1 // pred_check_branch
      %42 = sbr.rel (0) target = $region33
    $region32: #{vnn_forward.1} parent=1 // pred_region
      _
    $region33: #{vnn_forward.1} parent=1 // pred_fallthru
      _
    // Predicated region
    $region34: #{vnn_forward.1} parent=1 // pred_check
      _
    $region35: #{vnn_forward.1} parent=1 // pred_check_branch
      %44 = sbr.rel (0) target = $region37
    $region36: #{vnn_forward.1} parent=1 // pred_region
      _
    $region37: #{vnn_forward.1} parent=1 // pred_fallthru
      _
    // Predicated region
    $region38: #{vnn_forward.1} parent=1 // pred_check
      _
    $region39: #{vnn_forward.1} parent=1 // pred_check_branch
      %46 = sbr.rel (0) target = $region41
    $region40: #{vnn_forward.1} parent=1 // pred_region
      _
    $region41: #{vnn_forward.1} parent=1 // pred_fallthru
      _
    // Predicated region
    $region42: #{vnn_forward.1} parent=1 // pred_check
      _
    $region43: #{vnn_forward.1} parent=1 // pred_check_branch
      %48 = sbr.rel (0) target = $region45
    $region44: #{vnn_forward.1} parent=1 // pred_region
      _
    $region45: #{vnn_forward.1} parent=1 // pred_fallthru
      _
    // Predicated region
    $region46: #{vnn_forward.1} parent=1 // pred_check
      _
    $region47: #{vnn_forward.1} parent=1 // pred_check_branch
      %50 = sbr.rel (0) target = $region49
    $region48: #{vnn_forward.1} parent=1 // pred_region
      %51 = dma.done [#allocation3], 3072
    $region49: #{vnn_forward.1} parent=1 // pred_fallthru
      _
    %v52 = vld [vmem:[%s0] sm:$0xff]
    %54 = vset.pattern.permute.xlu0 0
    %55 = vperm.xlu0 %54, %v52
    %v56 = vpop.permute.xlu0 %55
    %58 = vset.pattern.permute.xlu0 1
    %59 = vperm.xlu0 %58, %v52
    %v60 = vpop.permute.xlu0 %59
    %62 = vset.pattern.permute.xlu0 2
    %63 = vperm.xlu0 %62, %v52
    %v64 = vpop.permute.xlu0 %63
    %66 = vset.pattern.permute.xlu0 3
    %67 = vperm.xlu0 %66, %v52
    %v68 = vpop.permute.xlu0 %67
    %70 = vset.pattern.permute.xlu0 4
    %71 = vperm.xlu0 %70, %v52
    %v72 = vpop.permute.xlu0 %71
    %74 = vset.pattern.permute.xlu0 5
    %75 = vperm.xlu0 %74, %v52
    %v76 = vpop.permute.xlu0 %75
    %78 = vset.pattern.permute.xlu0 6
    %79 = vperm.xlu0 %78, %v52
    %v80 = vpop.permute.xlu0 %79
    %82 = vset.pattern.permute.xlu0 7
    %83 = vperm.xlu0 %82, %v52
    %v84 = vpop.permute.xlu0 %83
    %86 = vset.pattern.permute.xlu0 8
    %87 = vperm.xlu0 %86, %v52
    %v88 = vpop.permute.xlu0 %87
    %v90 = vld [vmem:[%s2] sm:$0x1]
    %v91 = vld [vmem:[%s2 + $0x1] sm:$0x1]
    %v92 = vld [vmem:[%s2 + $0x2] sm:$0x1]
    %v93 = vld [vmem:[%s3] sm:$0x1]
    %v94 = vld [vmem:[%s8] sm:$0xff]
    %v95 = vld [vmem:[%s8 + $0x8] sm:$0xff]
    %v96 = vld [vmem:[%s8 + $0x10] sm:$0xff]
    %v97 = vld [vmem:[%s8 + $0x18] sm:$0xff]
    %v98 = vld [vmem:[%s8 + $0x20] sm:$0xff]
    %v99 = vld [vmem:[%s8 + $0x28] sm:$0xff]
    %v100 = vld [vmem:[%s8 + $0x30] sm:$0xff]
    %v101 = vld [vmem:[%s8 + $0x38] sm:$0xff]
    %v102 = vld [vmem:[%s9] sm:$0x1]
    %v103 = vld [vmem:[%s10] sm:$0xff]
    %v104 = vld [vmem:[%s10 + $0x8] sm:$0xff]
    %v105 = vld [vmem:[%s1] sm:$0xff]
    %v106 = vmul.f32 %v52, %v105
    %108 = vrot.lane.b32.xlu0 %v106, 127
    %v109 = vpop.permute.xlu0 %108
    %v111 = vadd.f32 %v106, %v109
    %112 = vrot.lane.b32.xlu0 %v106, 126
    %v113 = vpop.permute.xlu0 %112
    %v115 = vadd.f32 %v111, %v113
    %117 = vrot.lane.b32.xlu0 %v105, 3
    %v118 = vpop.permute.xlu0 %117
    %v120 = vmul.f32 %v52, %v118
    %122 = vrot.lane.b32.xlu0 %v120, 127
    %v123 = vpop.permute.xlu0 %122
    %v125 = vadd.f32 %v120, %v123
    %126 = vrot.lane.b32.xlu0 %v120, 126
    %v127 = vpop.permute.xlu0 %126
    %v129 = vadd.f32 %v125, %v127
    %130 = vrot.lane.b32.xlu0 %v105, 6
    %v131 = vpop.permute.xlu0 %130
    %v133 = vmul.f32 %v52, %v131
    %135 = vrot.lane.b32.xlu0 %v133, 127
    %v136 = vpop.permute.xlu0 %135
    %v138 = vadd.f32 %v133, %v136
    %139 = vrot.lane.b32.xlu0 %v133, 126
    %v140 = vpop.permute.xlu0 %139
    %v142 = vadd.f32 %v138, %v140
    %v143 = vmul.f32 %v52, %v115
    %145 = vrot.lane.b32.xlu0 %v129, 126
    %v146 = vpop.permute.xlu0 %145
    %v148 = vmul.f32 %v52, %v146
    %150 = vrot.lane.b32.xlu0 %v148, 127
    %v151 = vpop.permute.xlu0 %150
    %v153 = vadd.f32 %v143, %v151
    %155 = vrot.lane.b32.xlu0 %v142, 124
    %v156 = vpop.permute.xlu0 %155
    %v158 = vmul.f32 %v52, %v156
    %160 = vrot.lane.b32.xlu0 %v158, 126
    %v161 = vpop.permute.xlu0 %160
    %v163 = vadd.f32 %v153, %v161
    %165 = vrot.lane.b32.xlu0 %v115, 3
    %v166 = vpop.permute.xlu0 %165
    %v168 = vmul.f32 %v52, %v166
    %169 = vrot.lane.b32.xlu0 %v129, 1
    %v170 = vpop.permute.xlu0 %169
    %v172 = vmul.f32 %v52, %v170
    %174 = vrot.lane.b32.xlu0 %v172, 127
    %v175 = vpop.permute.xlu0 %174
    %v177 = vadd.f32 %v168, %v175
    %178 = vrot.lane.b32.xlu0 %v142, 127
    %v179 = vpop.permute.xlu0 %178
    %v181 = vmul.f32 %v52, %v179
    %183 = vrot.lane.b32.xlu0 %v181, 126
    %v184 = vpop.permute.xlu0 %183
    %v186 = vadd.f32 %v177, %v184
    %187 = vrot.lane.b32.xlu0 %v115, 6
    %v188 = vpop.permute.xlu0 %187
    %v190 = vmul.f32 %v52, %v188
    %191 = vrot.lane.b32.xlu0 %v129, 4
    %v192 = vpop.permute.xlu0 %191
    %v194 = vmul.f32 %v52, %v192
    %196 = vrot.lane.b32.xlu0 %v194, 127
    %v197 = vpop.permute.xlu0 %196
    %v199 = vadd.f32 %v190, %v197
    %200 = vrot.lane.b32.xlu0 %v142, 2
    %v201 = vpop.permute.xlu0 %200
    %v203 = vmul.f32 %v52, %v201
    %205 = vrot.lane.b32.xlu0 %v203, 126
    %v206 = vpop.permute.xlu0 %205
    %v208 = vadd.f32 %v199, %v206
    %209 = vset.pattern.permute.xlu0 0
    %210 = vperm.xlu0 %209, %v105
    %v211 = vpop.permute.xlu0 %210
    %v213 = vlaneseq
    %v214 = vshrl.u32 %v213, 7
    %v215 = vsub.s32 0, %v214
    %v216 = vrot.slane %v90, %v215
    %v217 = vmul.f32 %v211, %v216
    %218 = vset.pattern.permute.xlu0 0
    %219 = vperm.xlu0 %218, %v115
    %v220 = vpop.permute.xlu0 %219
    %v222 = vlaneseq
    %v223 = vshrl.u32 %v222, 7
    %v224 = vsub.s32 0, %v223
    %v225 = vrot.slane %v91, %v224
    %v226 = vmul.f32 %v220, %v225
    %v227 = vadd.f32 %v217, %v226
    %229 = vset.pattern.permute.xlu0 0
    %230 = vperm.xlu0 %229, %v163
    %v231 = vpop.permute.xlu0 %230
    %v233 = vlaneseq
    %v234 = vshrl.u32 %v233, 7
    %v235 = vsub.s32 0, %v234
    %v236 = vrot.slane %v92, %v235
    %v237 = vmul.f32 %v231, %v236
    %v238 = vadd.f32 %v227, %v237
    %v240 = vlaneseq
    %v241 = vshrl.u32 %v240, 7
    %v242 = vsub.s32 0, %v241
    %v243 = vrot.slane %v93, %v242
    %v245 = vadd.f32 %v238, %v243
    %vm246 = vcmp.gt.f32.partialorder %v245, 0.0
    %v247 = vmul.f32 %v245, 0.2
    %v248 = vsel %vm246, %v245, %v247
    %249 = vset.pattern.permute.xlu0 1
    %250 = vperm.xlu0 %249, %v105
    %v251 = vpop.permute.xlu0 %250
    %v253 = vmul.f32 %v251, %v216
    %254 = vset.pattern.permute.xlu0 3
    %255 = vperm.xlu0 %254, %v129
    %v256 = vpop.permute.xlu0 %255
    %v258 = vmul.f32 %v256, %v225
    %v259 = vadd.f32 %v253, %v258
    %261 = vset.pattern.permute.xlu0 3
    %262 = vperm.xlu0 %261, %v186
    %v263 = vpop.permute.xlu0 %262
    %v265 = vmul.f32 %v263, %v236
    %v266 = vadd.f32 %v259, %v265
    %v267 = vadd.f32 %v266, %v243
    %vm268 = vcmp.gt.f32.partialorder %v267, 0.0
    %v269 = vmul.f32 %v267, 0.2
    %v270 = vsel %vm268, %v267, %v269
    %271 = vset.pattern.permute.xlu0 2
    %272 = vperm.xlu0 %271, %v105
    %v273 = vpop.permute.xlu0 %272
    %v275 = vmul.f32 %v273, %v216
    %276 = vset.pattern.permute.xlu0 6
    %277 = vperm.xlu0 %276, %v142
    %v278 = vpop.permute.xlu0 %277
    %v280 = vmul.f32 %v278, %v225
    %v281 = vadd.f32 %v275, %v280
    %283 = vset.pattern.permute.xlu0 6
    %284 = vperm.xlu0 %283, %v208
    %v285 = vpop.permute.xlu0 %284
    %v287 = vmul.f32 %v285, %v236
    %v288 = vadd.f32 %v281, %v287
    %v289 = vadd.f32 %v288, %v243
    %vm290 = vcmp.gt.f32.partialorder %v289, 0.0
    %v291 = vmul.f32 %v289, 0.2
    %v292 = vsel %vm290, %v289, %v291
    %v293 = vmul.f32 %v56, %v248
    %v294 = vmul.f32 %v60, %v270
    %v295 = vadd.f32 %v293, %v294
    %v296 = vmul.f32 %v64, %v292
    %v297 = vadd.f32 %v295, %v296
    %v298 = vmul.f32 %v68, %v248
    %v299 = vmul.f32 %v72, %v270
    %v300 = vadd.f32 %v298, %v299
    %v301 = vmul.f32 %v76, %v292
    %v302 = vadd.f32 %v300, %v301
    %v303 = vmul.f32 %v80, %v248
    %v304 = vmul.f32 %v84, %v270
    %v305 = vadd.f32 %v303, %v304
    %v306 = vmul.f32 %v88, %v292
    %v307 = vadd.f32 %v305, %v306
    %v308 = vmul.f32 %v56, %v297
    %v309 = vmul.f32 %v60, %v302
    %v310 = vadd.f32 %v308, %v309
    %v311 = vmul.f32 %v64, %v307
    %v312 = vadd.f32 %v310, %v311
    %v313 = vmul.f32 %v68, %v297
    %v314 = vmul.f32 %v72, %v302
    %v315 = vadd.f32 %v313, %v314
    %v316 = vmul.f32 %v76, %v307
    %v317 = vadd.f32 %v315, %v316
    %v318 = vmul.f32 %v80, %v297
    %v319 = vmul.f32 %v84, %v302
    %v320 = vadd.f32 %v318, %v319
    %v321 = vmul.f32 %v88, %v307
    %v322 = vadd.f32 %v320, %v321
    %v323 = vld [vmem:[%s4] sm:$0xff]
    %v324 = vld [vmem:[%s4 + $0x8] sm:$0xff]
    %v325 = vld [vmem:[%s4 + $0x10] sm:$0xff]
    %v326 = vld [vmem:[%s4 + $0x18] sm:$0xff]
    %v327 = vld [vmem:[%s4 + $0x20] sm:$0xff]
    %v328 = vld [vmem:[%s4 + $0x28] sm:$0xff]
    %v329 = vld [vmem:[%s4 + $0x30] sm:$0xff]
    %v330 = vld [vmem:[%s4 + $0x38] sm:$0xff]
    %s331 = scalar_lea.vmem %s4, 64
    %v332 = vld [vmem:[%s331] sm:$0xff]
    %v333 = vld [vmem:[%s331 + $0x8] sm:$0xff]
    %v334 = vld [vmem:[%s331 + $0x10] sm:$0xff]
    %v335 = vld [vmem:[%s331 + $0x18] sm:$0xff]
    %v336 = vld [vmem:[%s331 + $0x20] sm:$0xff]
    %v337 = vld [vmem:[%s331 + $0x28] sm:$0xff]
    %v338 = vld [vmem:[%s331 + $0x30] sm:$0xff]
    %v339 = vld [vmem:[%s331 + $0x38] sm:$0xff]
    %vm340 = vcmask 523264
    %v342 = vsel %vm340, %v297, 0
    %v345 = vsel %vm340, %v302, 0
    %v348 = vsel %vm340, %v307, 0
    %350 = vmatprep.subr.mxu0 0.0
    %351 = vmatpush1.msra.mxu0 %v332
    %352 = vmatprep.subr.mxu0 0.0
    %353 = vmatpush1.msra.mxu0 %v333
    %354 = vmatprep.subr.mxu0 0.0
    %355 = vmatpush1.msra.mxu0 %v334
    %356 = vmatprep.subr.mxu0 0.0
    %357 = vmatpush1.msra.mxu0 %v335
    %358 = vmatprep.subr.mxu0 0.0
    %359 = vmatpush1.msra.mxu0 %v336
    %360 = vmatprep.subr.mxu0 0.0
    %361 = vmatpush1.msra.mxu0 %v337
    %362 = vmatprep.subr.mxu0 0.0
    %363 = vmatpush1.msra.mxu0 %v338
    %364 = vmatprep.subr.mxu0 0.0
    %365 = vmatpush1.msra.mxu0 %v339
    %366 = vmatprep.subr.mxu0 0.0
    %367 = vmatpush1.msra.mxu0 0.0
    %368 = vmatprep.subr.mxu0 0.0
    %369 = vmatpush1.msra.mxu0 0.0
    %370 = vmatprep.subr.mxu0 0.0
    %371 = vmatpush1.msra.mxu0 0.0
    %372 = vmatprep.subr.mxu0 0.0
    %373 = vmatpush1.msra.mxu0 0.0
    %374 = vmatprep.subr.mxu0 0.0
    %375 = vmatpush1.msra.mxu0 0.0
    %376 = vmatprep.subr.mxu0 0.0
    %377 = vmatpush1.msra.mxu0 0.0
    %378 = vmatprep.subr.mxu0 0.0
    %379 = vmatpush1.msra.mxu0 0.0
    %380 = vmatprep.subr.mxu0 0.0
    %381 = vmatpush1.msra.mxu0 0.0
    %382 = vmatprep.subr.mxu0 0.0
    %383 = vmatpush1.msra.mxu0 0.0
    %384 = vmatprep.subr.mxu0 0.0
    %385 = vmatpush1.msra.mxu0 0.0
    %386 = vmatprep.subr.mxu0 0.0
    %387 = vmatpush1.msra.mxu0 0.0
    %388 = vmatprep.subr.mxu0 0.0
    %389 = vmatpush1.msra.mxu0 0.0
    %390 = vmatprep.subr.mxu0 0.0
    %391 = vmatpush1.msra.mxu0 0.0
    %392 = vmatprep.subr.mxu0 0.0
    %393 = vmatpush1.msra.mxu0 0.0
    %394 = vmatprep.subr.mxu0 0.0
    %395 = vmatpush1.msra.mxu0 0.0
    %396 = vmatprep.subr.mxu0 0.0
    %397 = vmatpush1.msra.mxu0 0.0
    %398 = vmatprep.subr.mxu0 0.0
    %399 = vmatpush1.msra.mxu0 0.0
    %400 = vmatprep.subr.mxu0 0.0
    %401 = vmatpush1.msra.mxu0 0.0
    %402 = vmatprep.subr.mxu0 0.0
    %403 = vmatpush1.msra.mxu0 0.0
    %404 = vmatprep.subr.mxu0 0.0
    %405 = vmatpush1.msra.mxu0 0.0
    %406 = vmatprep.subr.mxu0 0.0
    %407 = vmatpush1.msra.mxu0 0.0
    %408 = vmatprep.subr.mxu0 0.0
    %409 = vmatpush1.msra.mxu0 0.0
    %410 = vmatprep.subr.mxu0 0.0
    %411 = vmatpush1.msra.mxu0 0.0
    %412 = vmatprep.subr.mxu0 0.0
    %413 = vmatpush1.msra.mxu0 0.0
    %414 = vmatprep.mubr.f32.mxu0 0.0
    %415 = vmatmul.mubr.f32.gmra.mrb[0].mxu0 %v342
    %v416 = vpop.f32.mrb[0].mxu0
    %v417 = vadd.f32 0.0, %v416
    %v418 = vpop.f32.mrb[0].mxu0
    %419 = vmatprep.mubr.f32.mxu0 0.0
    %420 = vmatmul.mubr.f32.gmra.mrb[0].mxu0 %v345
    %v421 = vpop.f32.mrb[0].mxu0
    %v422 = vadd.f32 0.0, %v421
    %v423 = vpop.f32.mrb[0].mxu0
    %424 = vmatprep.mubr.f32.mxu0 0.0
    %425 = vmatmul.mubr.f32.gmra.mrb[0].mxu0 %v348
    %v426 = vpop.f32.mrb[0].mxu0
    %v427 = vadd.f32 0.0, %v426
    %v428 = vpop.f32.mrb[0].mxu0
    %429 = vdwg.mxu0
    %v431 = vsel %vm340, %v248, 0
    %v434 = vsel %vm340, %v270, 0
    %v437 = vsel %vm340, %v292, 0
    %439 = vmatprep.subr.mxu0 0.0
    %440 = vmatpush1.msra.mxu0 %v323
    %441 = vmatprep.subr.mxu0 0.0
    %442 = vmatpush1.msra.mxu0 %v324
    %443 = vmatprep.subr.mxu0 0.0
    %444 = vmatpush1.msra.mxu0 %v325
    %445 = vmatprep.subr.mxu0 0.0
    %446 = vmatpush1.msra.mxu0 %v326
    %447 = vmatprep.subr.mxu0 0.0
    %448 = vmatpush1.msra.mxu0 %v327
    %449 = vmatprep.subr.mxu0 0.0
    %450 = vmatpush1.msra.mxu0 %v328
    %451 = vmatprep.subr.mxu0 0.0
    %452 = vmatpush1.msra.mxu0 %v329
    %453 = vmatprep.subr.mxu0 0.0
    %454 = vmatpush1.msra.mxu0 %v330
    %455 = vmatprep.subr.mxu0 0.0
    %456 = vmatpush1.msra.mxu0 0.0
    %457 = vmatprep.subr.mxu0 0.0
    %458 = vmatpush1.msra.mxu0 0.0
    %459 = vmatprep.subr.mxu0 0.0
    %460 = vmatpush1.msra.mxu0 0.0
    %461 = vmatprep.subr.mxu0 0.0
    %462 = vmatpush1.msra.mxu0 0.0
    %463 = vmatprep.subr.mxu0 0.0
    %464 = vmatpush1.msra.mxu0 0.0
    %465 = vmatprep.subr.mxu0 0.0
    %466 = vmatpush1.msra.mxu0 0.0
    %467 = vmatprep.subr.mxu0 0.0
    %468 = vmatpush1.msra.mxu0 0.0
    %469 = vmatprep.subr.mxu0 0.0
    %470 = vmatpush1.msra.mxu0 0.0
    %471 = vmatprep.subr.mxu0 0.0
    %472 = vmatpush1.msra.mxu0 0.0
    %473 = vmatprep.subr.mxu0 0.0
    %474 = vmatpush1.msra.mxu0 0.0
    %475 = vmatprep.subr.mxu0 0.0
    %476 = vmatpush1.msra.mxu0 0.0
    %477 = vmatprep.subr.mxu0 0.0
    %478 = vmatpush1.msra.mxu0 0.0
    %479 = vmatprep.subr.mxu0 0.0
    %480 = vmatpush1.msra.mxu0 0.0
    %481 = vmatprep.subr.mxu0 0.0
    %482 = vmatpush1.msra.mxu0 0.0
    %483 = vmatprep.subr.mxu0 0.0
    %484 = vmatpush1.msra.mxu0 0.0
    %485 = vmatprep.subr.mxu0 0.0
    %486 = vmatpush1.msra.mxu0 0.0
    %487 = vmatprep.subr.mxu0 0.0
    %488 = vmatpush1.msra.mxu0 0.0
    %489 = vmatprep.subr.mxu0 0.0
    %490 = vmatpush1.msra.mxu0 0.0
    %491 = vmatprep.subr.mxu0 0.0
    %492 = vmatpush1.msra.mxu0 0.0
    %493 = vmatprep.subr.mxu0 0.0
    %494 = vmatpush1.msra.mxu0 0.0
    %495 = vmatprep.subr.mxu0 0.0
    %496 = vmatpush1.msra.mxu0 0.0
    %497 = vmatprep.subr.mxu0 0.0
    %498 = vmatpush1.msra.mxu0 0.0
    %499 = vmatprep.subr.mxu0 0.0
    %500 = vmatpush1.msra.mxu0 0.0
    %501 = vmatprep.subr.mxu0 0.0
    %502 = vmatpush1.msra.mxu0 0.0
    %503 = vmatprep.mubr.f32.mxu0 0.0
    %504 = vmatmul.mubr.f32.gmra.mrb[0].mxu0 %v431
    %v505 = vpop.f32.mrb[0].mxu0
    %v506 = vadd.f32 %v417, %v505
    %v507 = vpop.f32.mrb[0].mxu0
    %508 = vmatprep.mubr.f32.mxu0 0.0
    %509 = vmatmul.mubr.f32.gmra.mrb[0].mxu0 %v434
    %v510 = vpop.f32.mrb[0].mxu0
    %v511 = vadd.f32 %v422, %v510
    %v512 = vpop.f32.mrb[0].mxu0
    %513 = vmatprep.mubr.f32.mxu0 0.0
    %514 = vmatmul.mubr.f32.gmra.mrb[0].mxu0 %v437
    %v515 = vpop.f32.mrb[0].mxu0
    %v516 = vadd.f32 %v427, %v515
    %v517 = vpop.f32.mrb[0].mxu0
    %518 = vdwg.mxu0
    %s519 = scalar_lea.vmem %s4, 128
    %v520 = vld [vmem:[%s519] sm:$0xff]
    %v521 = vld [vmem:[%s519 + $0x8] sm:$0xff]
    %v522 = vld [vmem:[%s519 + $0x10] sm:$0xff]
    %v523 = vld [vmem:[%s519 + $0x18] sm:$0xff]
    %v524 = vld [vmem:[%s519 + $0x20] sm:$0xff]
    %v525 = vld [vmem:[%s519 + $0x28] sm:$0xff]
    %v526 = vld [vmem:[%s519 + $0x30] sm:$0xff]
    %v527 = vld [vmem:[%s519 + $0x38] sm:$0xff]
    %v529 = vsel %vm340, %v312, 0
    %v532 = vsel %vm340, %v317, 0
    %v535 = vsel %vm340, %v322, 0
    %537 = vmatprep.subr.mxu0 0.0
    %538 = vmatpush1.msra.mxu0 %v520
    %539 = vmatprep.subr.mxu0 0.0
    %540 = vmatpush1.msra.mxu0 %v521
    %541 = vmatprep.subr.mxu0 0.0
    %542 = vmatpush1.msra.mxu0 %v522
    %543 = vmatprep.subr.mxu0 0.0
    %544 = vmatpush1.msra.mxu0 %v523
    %545 = vmatprep.subr.mxu0 0.0
    %546 = vmatpush1.msra.mxu0 %v524
    %547 = vmatprep.subr.mxu0 0.0
    %548 = vmatpush1.msra.mxu0 %v525
    %549 = vmatprep.subr.mxu0 0.0
    %550 = vmatpush1.msra.mxu0 %v526
    %551 = vmatprep.subr.mxu0 0.0
    %552 = vmatpush1.msra.mxu0 %v527
    %553 = vmatprep.subr.mxu0 0.0
    %554 = vmatpush1.msra.mxu0 0.0
    %555 = vmatprep.subr.mxu0 0.0
    %556 = vmatpush1.msra.mxu0 0.0
    %557 = vmatprep.subr.mxu0 0.0
    %558 = vmatpush1.msra.mxu0 0.0
    %559 = vmatprep.subr.mxu0 0.0
    %560 = vmatpush1.msra.mxu0 0.0
    %561 = vmatprep.subr.mxu0 0.0
    %562 = vmatpush1.msra.mxu0 0.0
    %563 = vmatprep.subr.mxu0 0.0
    %564 = vmatpush1.msra.mxu0 0.0
    %565 = vmatprep.subr.mxu0 0.0
    %566 = vmatpush1.msra.mxu0 0.0
    %567 = vmatprep.subr.mxu0 0.0
    %568 = vmatpush1.msra.mxu0 0.0
    %569 = vmatprep.subr.mxu0 0.0
    %570 = vmatpush1.msra.mxu0 0.0
    %571 = vmatprep.subr.mxu0 0.0
    %572 = vmatpush1.msra.mxu0 0.0
    %573 = vmatprep.subr.mxu0 0.0
    %574 = vmatpush1.msra.mxu0 0.0
    %575 = vmatprep.subr.mxu0 0.0
    %576 = vmatpush1.msra.mxu0 0.0
    %577 = vmatprep.subr.mxu0 0.0
    %578 = vmatpush1.msra.mxu0 0.0
    %579 = vmatprep.subr.mxu0 0.0
    %580 = vmatpush1.msra.mxu0 0.0
    %581 = vmatprep.subr.mxu0 0.0
    %582 = vmatpush1.msra.mxu0 0.0
    %583 = vmatprep.subr.mxu0 0.0
    %584 = vmatpush1.msra.mxu0 0.0
    %585 = vmatprep.subr.mxu0 0.0
    %586 = vmatpush1.msra.mxu0 0.0
    %587 = vmatprep.subr.mxu0 0.0
    %588 = vmatpush1.msra.mxu0 0.0
    %589 = vmatprep.subr.mxu0 0.0
    %590 = vmatpush1.msra.mxu0 0.0
    %591 = vmatprep.subr.mxu0 0.0
    %592 = vmatpush1.msra.mxu0 0.0
    %593 = vmatprep.subr.mxu0 0.0
    %594 = vmatpush1.msra.mxu0 0.0
    %595 = vmatprep.subr.mxu0 0.0
    %596 = vmatpush1.msra.mxu0 0.0
    %597 = vmatprep.subr.mxu0 0.0
    %598 = vmatpush1.msra.mxu0 0.0
    %599 = vmatprep.subr.mxu0 0.0
    %600 = vmatpush1.msra.mxu0 0.0
    %601 = vmatprep.mubr.f32.mxu0 0.0
    %602 = vmatmul.mubr.f32.gmra.mrb[0].mxu0 %v529
    %v603 = vpop.f32.mrb[0].mxu0
    %v604 = vadd.f32 0.0, %v603
    %v605 = vpop.f32.mrb[0].mxu0
    %606 = vmatprep.mubr.f32.mxu0 0.0
    %607 = vmatmul.mubr.f32.gmra.mrb[0].mxu0 %v532
    %v608 = vpop.f32.mrb[0].mxu0
    %v609 = vadd.f32 0.0, %v608
    %v610 = vpop.f32.mrb[0].mxu0
    %611 = vmatprep.mubr.f32.mxu0 0.0
    %612 = vmatmul.mubr.f32.gmra.mrb[0].mxu0 %v535
    %v613 = vpop.f32.mrb[0].mxu0
    %v614 = vadd.f32 0.0, %v613
    %v615 = vpop.f32.mrb[0].mxu0
    %616 = vdwg.mxu0
    %v617 = vadd.f32 %v506, %v604
    %v618 = vadd.f32 %v511, %v609
    %v619 = vadd.f32 %v516, %v614
    %v620 = vld [vmem:[%s5] sm:$0x1]
    %v622 = vlaneseq
    %v623 = vshrl.u32 %v622, 7
    %v624 = vsub.s32 0, %v623
    %v625 = vrot.slane %v620, %v624
    %v627 = vadd.f32 %v617, %v625
    %v628 = vadd.f32 %v618, %v625
    %v629 = vadd.f32 %v619, %v625
    %vm630 = vcmp.gt.f32.partialorder %v627, 0.0
    %v631 = vmul.f32 %v627, 0.2
    %v632 = vsel %vm630, %v627, %v631
    %vm633 = vcmp.gt.f32.partialorder %v628, 0.0
    %v634 = vmul.f32 %v628, 0.2
    %v635 = vsel %vm633, %v628, %v634
    %vm636 = vcmp.gt.f32.partialorder %v629, 0.0
    %v637 = vmul.f32 %v629, 0.2
    %v638 = vsel %vm636, %v629, %v637
    %v639 = vmul.f32 %v56, %v632
    %v640 = vmul.f32 %v60, %v635
    %v641 = vadd.f32 %v639, %v640
    %v642 = vmul.f32 %v64, %v638
    %v643 = vadd.f32 %v641, %v642
    %v644 = vmul.f32 %v68, %v632
    %v645 = vmul.f32 %v72, %v635
    %v646 = vadd.f32 %v644, %v645
    %v647 = vmul.f32 %v76, %v638
    %v648 = vadd.f32 %v646, %v647
    %v649 = vmul.f32 %v80, %v632
    %v650 = vmul.f32 %v84, %v635
    %v651 = vadd.f32 %v649, %v650
    %v652 = vmul.f32 %v88, %v638
    %v653 = vadd.f32 %v651, %v652
    %v654 = vmul.f32 %v56, %v643
    %v655 = vmul.f32 %v60, %v648
    %v656 = vadd.f32 %v654, %v655
    %v657 = vmul.f32 %v64, %v653
    %v658 = vadd.f32 %v656, %v657
    %v659 = vmul.f32 %v68, %v643
    %v660 = vmul.f32 %v72, %v648
    %v661 = vadd.f32 %v659, %v660
    %v662 = vmul.f32 %v76, %v653
    %v663 = vadd.f32 %v661, %v662
    %v664 = vmul.f32 %v80, %v643
    %v665 = vmul.f32 %v84, %v648
    %v666 = vadd.f32 %v664, %v665
    %v667 = vmul.f32 %v88, %v653
    %v668 = vadd.f32 %v666, %v667
    %v669 = vld [vmem:[#allocation2] sm:$0xff]
    %v670 = vld [vmem:[#allocation2 + $0x8] sm:$0xff]
    %v671 = vld [vmem:[#allocation2 + $0x10] sm:$0xff]
    %v672 = vld [vmem:[#allocation2 + $0x18] sm:$0xff]
    %v673 = vld [vmem:[#allocation2 + $0x20] sm:$0xff]
    %v674 = vld [vmem:[#allocation2 + $0x28] sm:$0xff]
    %v675 = vld [vmem:[#allocation2 + $0x30] sm:$0xff]
    %v676 = vld [vmem:[#allocation2 + $0x38] sm:$0xff]
    %s677 = scalar_lea.vmem [#allocation2], 64
    %v678 = vld [vmem:[%s677] sm:$0xff]
    %v679 = vld [vmem:[%s677 + $0x8] sm:$0xff]
    %v680 = vld [vmem:[%s677 + $0x10] sm:$0xff]
    %v681 = vld [vmem:[%s677 + $0x18] sm:$0xff]
    %v682 = vld [vmem:[%s677 + $0x20] sm:$0xff]
    %v683 = vld [vmem:[%s677 + $0x28] sm:$0xff]
    %v684 = vld [vmem:[%s677 + $0x30] sm:$0xff]
    %v685 = vld [vmem:[%s677 + $0x38] sm:$0xff]
    %v687 = vsel %vm340, %v643, 0
    %v690 = vsel %vm340, %v648, 0
    %v693 = vsel %vm340, %v653, 0
    %695 = vmatprep.subr.mxu0 0.0
    %696 = vmatpush1.msra.mxu0 %v678
    %697 = vmatprep.subr.mxu0 0.0
    %698 = vmatpush1.msra.mxu0 %v679
    %699 = vmatprep.subr.mxu0 0.0
    %700 = vmatpush1.msra.mxu0 %v680
    %701 = vmatprep.subr.mxu0 0.0
    %702 = vmatpush1.msra.mxu0 %v681
    %703 = vmatprep.subr.mxu0 0.0
    %704 = vmatpush1.msra.mxu0 %v682
    %705 = vmatprep.subr.mxu0 0.0
    %706 = vmatpush1.msra.mxu0 %v683
    %707 = vmatprep.subr.mxu0 0.0
    %708 = vmatpush1.msra.mxu0 %v684
    %709 = vmatprep.subr.mxu0 0.0
    %710 = vmatpush1.msra.mxu0 %v685
    %711 = vmatprep.subr.mxu0 0.0
    %712 = vmatpush1.msra.mxu0 0.0
    %713 = vmatprep.subr.mxu0 0.0
    %714 = vmatpush1.msra.mxu0 0.0
    %715 = vmatprep.subr.mxu0 0.0
    %716 = vmatpush1.msra.mxu0 0.0
    %717 = vmatprep.subr.mxu0 0.0
    %718 = vmatpush1.msra.mxu0 0.0
    %719 = vmatprep.subr.mxu0 0.0
    %720 = vmatpush1.msra.mxu0 0.0
    %721 = vmatprep.subr.mxu0 0.0
    %722 = vmatpush1.msra.mxu0 0.0
    %723 = vmatprep.subr.mxu0 0.0
    %724 = vmatpush1.msra.mxu0 0.0
    %725 = vmatprep.subr.mxu0 0.0
    %726 = vmatpush1.msra.mxu0 0.0
    %727 = vmatprep.subr.mxu0 0.0
    %728 = vmatpush1.msra.mxu0 0.0
    %729 = vmatprep.subr.mxu0 0.0
    %730 = vmatpush1.msra.mxu0 0.0
    %731 = vmatprep.subr.mxu0 0.0
    %732 = vmatpush1.msra.mxu0 0.0
    %733 = vmatprep.subr.mxu0 0.0
    %734 = vmatpush1.msra.mxu0 0.0
    %735 = vmatprep.subr.mxu0 0.0
    %736 = vmatpush1.msra.mxu0 0.0
    %737 = vmatprep.subr.mxu0 0.0
    %738 = vmatpush1.msra.mxu0 0.0
    %739 = vmatprep.subr.mxu0 0.0
    %740 = vmatpush1.msra.mxu0 0.0
    %741 = vmatprep.subr.mxu0 0.0
    %742 = vmatpush1.msra.mxu0 0.0
    %743 = vmatprep.subr.mxu0 0.0
    %744 = vmatpush1.msra.mxu0 0.0
    %745 = vmatprep.subr.mxu0 0.0
    %746 = vmatpush1.msra.mxu0 0.0
    %747 = vmatprep.subr.mxu0 0.0
    %748 = vmatpush1.msra.mxu0 0.0
    %749 = vmatprep.subr.mxu0 0.0
    %750 = vmatpush1.msra.mxu0 0.0
    %751 = vmatprep.subr.mxu0 0.0
    %752 = vmatpush1.msra.mxu0 0.0
    %753 = vmatprep.subr.mxu0 0.0
    %754 = vmatpush1.msra.mxu0 0.0
    %755 = vmatprep.subr.mxu0 0.0
    %756 = vmatpush1.msra.mxu0 0.0
    %757 = vmatprep.subr.mxu0 0.0
    %758 = vmatpush1.msra.mxu0 0.0
    %759 = vmatprep.mubr.f32.mxu0 0.0
    %760 = vmatmul.mubr.f32.gmra.mrb[0].mxu0 %v687
    %v761 = vpop.f32.mrb[0].mxu0
    %v762 = vadd.f32 0.0, %v761
    %v763 = vpop.f32.mrb[0].mxu0
    %764 = vmatprep.mubr.f32.mxu0 0.0
    %765 = vmatmul.mubr.f32.gmra.mrb[0].mxu0 %v690
    %v766 = vpop.f32.mrb[0].mxu0
    %v767 = vadd.f32 0.0, %v766
    %v768 = vpop.f32.mrb[0].mxu0
    %769 = vmatprep.mubr.f32.mxu0 0.0
    %770 = vmatmul.mubr.f32.gmra.mrb[0].mxu0 %v693
    %v771 = vpop.f32.mrb[0].mxu0
    %v772 = vadd.f32 0.0, %v771
    %v773 = vpop.f32.mrb[0].mxu0
    %774 = vdwg.mxu0
    %v776 = vsel %vm340, %v632, 0
    %v779 = vsel %vm340, %v635, 0
    %v782 = vsel %vm340, %v638, 0
    %784 = vmatprep.subr.mxu0 0.0
    %785 = vmatpush1.msra.mxu0 %v669
    %786 = vmatprep.subr.mxu0 0.0
    %787 = vmatpush1.msra.mxu0 %v670
    %788 = vmatprep.subr.mxu0 0.0
    %789 = vmatpush1.msra.mxu0 %v671
    %790 = vmatprep.subr.mxu0 0.0
    %791 = vmatpush1.msra.mxu0 %v672
    %792 = vmatprep.subr.mxu0 0.0
    %793 = vmatpush1.msra.mxu0 %v673
    %794 = vmatprep.subr.mxu0 0.0
    %795 = vmatpush1.msra.mxu0 %v674
    %796 = vmatprep.subr.mxu0 0.0
    %797 = vmatpush1.msra.mxu0 %v675
    %798 = vmatprep.subr.mxu0 0.0
    %799 = vmatpush1.msra.mxu0 %v676
    %800 = vmatprep.subr.mxu0 0.0
    %801 = vmatpush1.msra.mxu0 0.0
    %802 = vmatprep.subr.mxu0 0.0
    %803 = vmatpush1.msra.mxu0 0.0
    %804 = vmatprep.subr.mxu0 0.0
    %805 = vmatpush1.msra.mxu0 0.0
    %806 = vmatprep.subr.mxu0 0.0
    %807 = vmatpush1.msra.mxu0 0.0
    %808 = vmatprep.subr.mxu0 0.0
    %809 = vmatpush1.msra.mxu0 0.0
    %810 = vmatprep.subr.mxu0 0.0
    %811 = vmatpush1.msra.mxu0 0.0
    %812 = vmatprep.subr.mxu0 0.0
    %813 = vmatpush1.msra.mxu0 0.0
    %814 = vmatprep.subr.mxu0 0.0
    %815 = vmatpush1.msra.mxu0 0.0
    %816 = vmatprep.subr.mxu0 0.0
    %817 = vmatpush1.msra.mxu0 0.0
    %818 = vmatprep.subr.mxu0 0.0
    %819 = vmatpush1.msra.mxu0 0.0
    %820 = vmatprep.subr.mxu0 0.0
    %821 = vmatpush1.msra.mxu0 0.0
    %822 = vmatprep.subr.mxu0 0.0
    %823 = vmatpush1.msra.mxu0 0.0
    %824 = vmatprep.subr.mxu0 0.0
    %825 = vmatpush1.msra.mxu0 0.0
    %826 = vmatprep.subr.mxu0 0.0
    %827 = vmatpush1.msra.mxu0 0.0
    %828 = vmatprep.subr.mxu0 0.0
    %829 = vmatpush1.msra.mxu0 0.0
    %830 = vmatprep.subr.mxu0 0.0
    %831 = vmatpush1.msra.mxu0 0.0
    %832 = vmatprep.subr.mxu0 0.0
    %833 = vmatpush1.msra.mxu0 0.0
    %834 = vmatprep.subr.mxu0 0.0
    %835 = vmatpush1.msra.mxu0 0.0
    %836 = vmatprep.subr.mxu0 0.0
    %837 = vmatpush1.msra.mxu0 0.0
    %838 = vmatprep.subr.mxu0 0.0
    %839 = vmatpush1.msra.mxu0 0.0
    %840 = vmatprep.subr.mxu0 0.0
    %841 = vmatpush1.msra.mxu0 0.0
    %842 = vmatprep.subr.mxu0 0.0
    %843 = vmatpush1.msra.mxu0 0.0
    %844 = vmatprep.subr.mxu0 0.0
    %845 = vmatpush1.msra.mxu0 0.0
    %846 = vmatprep.subr.mxu0 0.0
    %847 = vmatpush1.msra.mxu0 0.0
    %848 = vmatprep.mubr.f32.mxu0 0.0
    %849 = vmatmul.mubr.f32.gmra.mrb[0].mxu0 %v776
    %v850 = vpop.f32.mrb[0].mxu0
    %v851 = vadd.f32 %v762, %v850
    %v852 = vpop.f32.mrb[0].mxu0
    %853 = vmatprep.mubr.f32.mxu0 0.0
    %854 = vmatmul.mubr.f32.gmra.mrb[0].mxu0 %v779
    %v855 = vpop.f32.mrb[0].mxu0
    %v856 = vadd.f32 %v767, %v855
    %v857 = vpop.f32.mrb[0].mxu0
    %858 = vmatprep.mubr.f32.mxu0 0.0
    %859 = vmatmul.mubr.f32.gmra.mrb[0].mxu0 %v782
    %v860 = vpop.f32.mrb[0].mxu0
    %v861 = vadd.f32 %v772, %v860
    %v862 = vpop.f32.mrb[0].mxu0
    %863 = vdwg.mxu0
    %s864 = scalar_lea.vmem [#allocation2], 128
    %v865 = vld [vmem:[%s864] sm:$0xff]
    %v866 = vld [vmem:[%s864 + $0x8] sm:$0xff]
    %v867 = vld [vmem:[%s864 + $0x10] sm:$0xff]
    %v868 = vld [vmem:[%s864 + $0x18] sm:$0xff]
    %v869 = vld [vmem:[%s864 + $0x20] sm:$0xff]
    %v870 = vld [vmem:[%s864 + $0x28] sm:$0xff]
    %v871 = vld [vmem:[%s864 + $0x30] sm:$0xff]
    %v872 = vld [vmem:[%s864 + $0x38] sm:$0xff]
    %v874 = vsel %vm340, %v658, 0
    %v877 = vsel %vm340, %v663, 0
    %v880 = vsel %vm340, %v668, 0
    %882 = vmatprep.subr.mxu0 0.0
    %883 = vmatpush1.msra.mxu0 %v865
    %884 = vmatprep.subr.mxu0 0.0
    %885 = vmatpush1.msra.mxu0 %v866
    %886 = vmatprep.subr.mxu0 0.0
    %887 = vmatpush1.msra.mxu0 %v867
    %888 = vmatprep.subr.mxu0 0.0
    %889 = vmatpush1.msra.mxu0 %v868
    %890 = vmatprep.subr.mxu0 0.0
    %891 = vmatpush1.msra.mxu0 %v869
    %892 = vmatprep.subr.mxu0 0.0
    %893 = vmatpush1.msra.mxu0 %v870
    %894 = vmatprep.subr.mxu0 0.0
    %895 = vmatpush1.msra.mxu0 %v871
    %896 = vmatprep.subr.mxu0 0.0
    %897 = vmatpush1.msra.mxu0 %v872
    %898 = vmatprep.subr.mxu0 0.0
    %899 = vmatpush1.msra.mxu0 0.0
    %900 = vmatprep.subr.mxu0 0.0
    %901 = vmatpush1.msra.mxu0 0.0
    %902 = vmatprep.subr.mxu0 0.0
    %903 = vmatpush1.msra.mxu0 0.0
    %904 = vmatprep.subr.mxu0 0.0
    %905 = vmatpush1.msra.mxu0 0.0
    %906 = vmatprep.subr.mxu0 0.0
    %907 = vmatpush1.msra.mxu0 0.0
    %908 = vmatprep.subr.mxu0 0.0
    %909 = vmatpush1.msra.mxu0 0.0
    %910 = vmatprep.subr.mxu0 0.0
    %911 = vmatpush1.msra.mxu0 0.0
    %912 = vmatprep.subr.mxu0 0.0
    %913 = vmatpush1.msra.mxu0 0.0
    %914 = vmatprep.subr.mxu0 0.0
    %915 = vmatpush1.msra.mxu0 0.0
    %916 = vmatprep.subr.mxu0 0.0
    %917 = vmatpush1.msra.mxu0 0.0
    %918 = vmatprep.subr.mxu0 0.0
    %919 = vmatpush1.msra.mxu0 0.0
    %920 = vmatprep.subr.mxu0 0.0
    %921 = vmatpush1.msra.mxu0 0.0
    %922 = vmatprep.subr.mxu0 0.0
    %923 = vmatpush1.msra.mxu0 0.0
    %924 = vmatprep.subr.mxu0 0.0
    %925 = vmatpush1.msra.mxu0 0.0
    %926 = vmatprep.subr.mxu0 0.0
    %927 = vmatpush1.msra.mxu0 0.0
    %928 = vmatprep.subr.mxu0 0.0
    %929 = vmatpush1.msra.mxu0 0.0
    %930 = vmatprep.subr.mxu0 0.0
    %931 = vmatpush1.msra.mxu0 0.0
    %932 = vmatprep.subr.mxu0 0.0
    %933 = vmatpush1.msra.mxu0 0.0
    %934 = vmatprep.subr.mxu0 0.0
    %935 = vmatpush1.msra.mxu0 0.0
    %936 = vmatprep.subr.mxu0 0.0
    %937 = vmatpush1.msra.mxu0 0.0
    %938 = vmatprep.subr.mxu0 0.0
    %939 = vmatpush1.msra.mxu0 0.0
    %940 = vmatprep.subr.mxu0 0.0
    %941 = vmatpush1.msra.mxu0 0.0
    %942 = vmatprep.subr.mxu0 0.0
    %943 = vmatpush1.msra.mxu0 0.0
    %944 = vmatprep.subr.mxu0 0.0
    %945 = vmatpush1.msra.mxu0 0.0
    %946 = vmatprep.mubr.f32.mxu0 0.0
    %947 = vmatmul.mubr.f32.gmra.mrb[0].mxu0 %v874
    %v948 = vpop.f32.mrb[0].mxu0
    %v949 = vadd.f32 0.0, %v948
    %v950 = vpop.f32.mrb[0].mxu0
    %951 = vmatprep.mubr.f32.mxu0 0.0
    %952 = vmatmul.mubr.f32.gmra.mrb[0].mxu0 %v877
    %v953 = vpop.f32.mrb[0].mxu0
    %v954 = vadd.f32 0.0, %v953
    %v955 = vpop.f32.mrb[0].mxu0
    %956 = vmatprep.mubr.f32.mxu0 0.0
    %957 = vmatmul.mubr.f32.gmra.mrb[0].mxu0 %v880
    %v958 = vpop.f32.mrb[0].mxu0
    %v959 = vadd.f32 0.0, %v958
    %v960 = vpop.f32.mrb[0].mxu0
    %961 = vdwg.mxu0
    %v962 = vadd.f32 %v851, %v949
    %v963 = vadd.f32 %v856, %v954
    %v964 = vadd.f32 %v861, %v959
    %v965 = vld [vmem:[%s7] sm:$0x1]
    %v967 = vlaneseq
    %v968 = vshrl.u32 %v967, 7
    %v969 = vsub.s32 0, %v968
    %v970 = vrot.slane %v965, %v969
    %v972 = vadd.f32 %v962, %v970
    %v973 = vadd.f32 %v963, %v970
    %v974 = vadd.f32 %v964, %v970
    %vm975 = vcmp.gt.f32.partialorder %v972, 0.0
    %v976 = vmul.f32 %v972, 0.2
    %v977 = vsel %vm975, %v972, %v976
    %vm978 = vcmp.gt.f32.partialorder %v973, 0.0
    %v979 = vmul.f32 %v973, 0.2
    %v980 = vsel %vm978, %v973, %v979
    %vm981 = vcmp.gt.f32.partialorder %v974, 0.0
    %v982 = vmul.f32 %v974, 0.2
    %v983 = vsel %vm981, %v974, %v982
    %v984 = vadd.f32 %v977, %v980
    %v985 = vadd.f32 %v984, %v983
    %v986 = vmul.f32 %v985, 0.33333334
    %v988 = vlaneseq
    %v989 = vshrl.u32 %v988, 7
    %v990 = vsub.s32 0, %v989
    %v991 = vrot.slane %v102, %v990
    %v994 = vsel %vm340, %v986, 0
    %996 = vmatprep.subr.mxu0 0.0
    %997 = vmatpush1.msra.mxu0 %v94
    %998 = vmatprep.subr.mxu0 0.0
    %999 = vmatpush1.msra.mxu0 %v95
    %1000 = vmatprep.subr.mxu0 0.0
    %1001 = vmatpush1.msra.mxu0 %v96
    %1002 = vmatprep.subr.mxu0 0.0
    %1003 = vmatpush1.msra.mxu0 %v97
    %1004 = vmatprep.subr.mxu0 0.0
    %1005 = vmatpush1.msra.mxu0 %v98
    %1006 = vmatprep.subr.mxu0 0.0
    %1007 = vmatpush1.msra.mxu0 %v99
    %1008 = vmatprep.subr.mxu0 0.0
    %1009 = vmatpush1.msra.mxu0 %v100
    %1010 = vmatprep.subr.mxu0 0.0
    %1011 = vmatpush1.msra.mxu0 %v101
    %1012 = vmatprep.subr.mxu0 0.0
    %1013 = vmatpush1.msra.mxu0 0.0
    %1014 = vmatprep.subr.mxu0 0.0
    %1015 = vmatpush1.msra.mxu0 0.0
    %1016 = vmatprep.subr.mxu0 0.0
    %1017 = vmatpush1.msra.mxu0 0.0
    %1018 = vmatprep.subr.mxu0 0.0
    %1019 = vmatpush1.msra.mxu0 0.0
    %1020 = vmatprep.subr.mxu0 0.0
    %1021 = vmatpush1.msra.mxu0 0.0
    %1022 = vmatprep.subr.mxu0 0.0
    %1023 = vmatpush1.msra.mxu0 0.0
    %1024 = vmatprep.subr.mxu0 0.0
    %1025 = vmatpush1.msra.mxu0 0.0
    %1026 = vmatprep.subr.mxu0 0.0
    %1027 = vmatpush1.msra.mxu0 0.0
    %1028 = vmatprep.subr.mxu0 0.0
    %1029 = vmatpush1.msra.mxu0 0.0
    %1030 = vmatprep.subr.mxu0 0.0
    %1031 = vmatpush1.msra.mxu0 0.0
    %1032 = vmatprep.subr.mxu0 0.0
    %1033 = vmatpush1.msra.mxu0 0.0
    %1034 = vmatprep.subr.mxu0 0.0
    %1035 = vmatpush1.msra.mxu0 0.0
    %1036 = vmatprep.subr.mxu0 0.0
    %1037 = vmatpush1.msra.mxu0 0.0
    %1038 = vmatprep.subr.mxu0 0.0
    %1039 = vmatpush1.msra.mxu0 0.0
    %1040 = vmatprep.subr.mxu0 0.0
    %1041 = vmatpush1.msra.mxu0 0.0
    %1042 = vmatprep.subr.mxu0 0.0
    %1043 = vmatpush1.msra.mxu0 0.0
    %1044 = vmatprep.subr.mxu0 0.0
    %1045 = vmatpush1.msra.mxu0 0.0
    %1046 = vmatprep.subr.mxu0 0.0
    %1047 = vmatpush1.msra.mxu0 0.0
    %1048 = vmatprep.subr.mxu0 0.0
    %1049 = vmatpush1.msra.mxu0 0.0
    %1050 = vmatprep.subr.mxu0 0.0
    %1051 = vmatpush1.msra.mxu0 0.0
    %1052 = vmatprep.subr.mxu0 0.0
    %1053 = vmatpush1.msra.mxu0 0.0
    %1054 = vmatprep.subr.mxu0 0.0
    %1055 = vmatpush1.msra.mxu0 0.0
    %1056 = vmatprep.subr.mxu0 0.0
    %1057 = vmatpush1.msra.mxu0 0.0
    %1058 = vmatprep.subr.mxu0 0.0
    %1059 = vmatpush1.msra.mxu0 0.0
    %1060 = vmatprep.mubr.f32.mxu0 0.0
    %1061 = vmatmul.mubr.f32.gmra.mrb[0].mxu0 %v994
    %v1062 = vpop.f32.mrb[0].mxu0
    %v1063 = vadd.f32 %v991, %v1062
    %v1064 = vpop.f32.mrb[0].mxu0
    %1065 = vdwg.mxu0
    %v1066 = vmul.f32 %v1063, %v1063
    %vm1067 = vcmask 130048
    %v1069 = vsel %vm1067, %v1066, 0
    %1071 = vmatprep.subr.mxu0 0.0
    %1072 = vmatpush1.msra.mxu0 %v103
    %1073 = vmatprep.subr.mxu0 0.0
    %1074 = vmatpush1.msra.mxu0 %v104
    %1075 = vmatprep.subr.mxu0 0.0
    %1076 = vmatpush1.msra.mxu0 0.0
    %1077 = vmatprep.subr.mxu0 0.0
    %1078 = vmatpush1.msra.mxu0 0.0
    %1079 = vmatprep.subr.mxu0 0.0
    %1080 = vmatpush1.msra.mxu0 0.0
    %1081 = vmatprep.subr.mxu0 0.0
    %1082 = vmatpush1.msra.mxu0 0.0
    %1083 = vmatprep.subr.mxu0 0.0
    %1084 = vmatpush1.msra.mxu0 0.0
    %1085 = vmatprep.subr.mxu0 0.0
    %1086 = vmatpush1.msra.mxu0 0.0
    %1087 = vmatprep.subr.mxu0 0.0
    %1088 = vmatpush1.msra.mxu0 0.0
    %1089 = vmatprep.subr.mxu0 0.0
    %1090 = vmatpush1.msra.mxu0 0.0
    %1091 = vmatprep.subr.mxu0 0.0
    %1092 = vmatpush1.msra.mxu0 0.0
    %1093 = vmatprep.subr.mxu0 0.0
    %1094 = vmatpush1.msra.mxu0 0.0
    %1095 = vmatprep.subr.mxu0 0.0
    %1096 = vmatpush1.msra.mxu0 0.0
    %1097 = vmatprep.subr.mxu0 0.0
    %1098 = vmatpush1.msra.mxu0 0.0
    %1099 = vmatprep.subr.mxu0 0.0
    %1100 = vmatpush1.msra.mxu0 0.0
    %1101 = vmatprep.subr.mxu0 0.0
    %1102 = vmatpush1.msra.mxu0 0.0
    %1103 = vmatprep.subr.mxu0 0.0
    %1104 = vmatpush1.msra.mxu0 0.0
    %1105 = vmatprep.subr.mxu0 0.0
    %1106 = vmatpush1.msra.mxu0 0.0
    %1107 = vmatprep.subr.mxu0 0.0
    %1108 = vmatpush1.msra.mxu0 0.0
    %1109 = vmatprep.subr.mxu0 0.0
    %1110 = vmatpush1.msra.mxu0 0.0
    %1111 = vmatprep.subr.mxu0 0.0
    %1112 = vmatpush1.msra.mxu0 0.0
    %1113 = vmatprep.subr.mxu0 0.0
    %1114 = vmatpush1.msra.mxu0 0.0
    %1115 = vmatprep.subr.mxu0 0.0
    %1116 = vmatpush1.msra.mxu0 0.0
    %1117 = vmatprep.subr.mxu0 0.0
    %1118 = vmatpush1.msra.mxu0 0.0
    %1119 = vmatprep.subr.mxu0 0.0
    %1120 = vmatpush1.msra.mxu0 0.0
    %1121 = vmatprep.subr.mxu0 0.0
    %1122 = vmatpush1.msra.mxu0 0.0
    %1123 = vmatprep.subr.mxu0 0.0
    %1124 = vmatpush1.msra.mxu0 0.0
    %1125 = vmatprep.subr.mxu0 0.0
    %1126 = vmatpush1.msra.mxu0 0.0
    %1127 = vmatprep.subr.mxu0 0.0
    %1128 = vmatpush1.msra.mxu0 0.0
    %1129 = vmatprep.subr.mxu0 0.0
    %1130 = vmatpush1.msra.mxu0 0.0
    %1131 = vmatprep.subr.mxu0 0.0
    %1132 = vmatpush1.msra.mxu0 0.0
    %1133 = vmatprep.subr.mxu0 0.0
    %1134 = vmatpush1.msra.mxu0 0.0
    %1135 = vmatprep.mubr.f32.mxu0 0.0
    %1136 = vmatmul.mubr.f32.gmra.mrb[0].mxu0 %v1069
    %v1137 = vpop.f32.mrb[0].mxu0
    %v1138 = vadd.f32 0.0, %v1137
    %v1139 = vpop.f32.mrb[0].mxu0
    %1140 = vdwg.mxu0
    %v1141 = vmax.f32 %v1138, 1e-24
    %v1142 = vrsqrt.pop %v1141
    %v1143 = vmul.f32 %v1063, %v1142
    %v1144 = vlaneseq
    %v1145 = vand.u32 %v1144, 127
    %vm1146 = vcmp.ge.s32.totalorder %v1145, 12
    %v1147 = vsel %vm1146, %v1063, -1e+30
    %v1148 = vsel %vm1067, %v1147, -inf
    %1149 = vmax.xlane.f32.xlu0 %v1148
    %v1150 = vpop.xlane.xlu0 %1149
    %v1151 = vsub.f32 %v1147, %v1150
    %v1152 = vmul.f32 %v1151, 1.442695
    %v1153 = vpow.pop %v1152
    %v1154 = vsel %vm1067, %v1153, 0.0
    %1155 = vadd.xlane.f32.xlu0 %v1154
    %v1156 = vpop.xlane.xlu0 %1155
    %v1157 = vrcp.pop %v1156
    %v1158 = vmul.f32 %v1156, %v1157
    %v1159 = vsub.f32 2.0, %v1158
    %v1160 = vmul.f32 %v1157, %v1159
    %v1161 = vmul.f32 %v1153, %v1160
    %v1162 = vsel %vm1146, %v1161, %v1143
    %1163 = vst.msk [vmem:[%s11] sm:$0xff] %vm1067, %v1162
    // Predicated region
    $region50: #{vnn_forward.1} parent=1 // pred_check
      _
    $region51: #{vnn_forward.1} parent=1 // pred_check_branch
      %1165 = sbr.rel (0) target = $region53
    $region52: #{vnn_forward.1} parent=1 // pred_region
      _
    $region53: #{vnn_forward.1} parent=1 // pred_fallthru
      _
    // Predicated region
    $region54: #{vnn_forward.1} parent=1 // pred_check
      _
    $region55: #{vnn_forward.1} parent=1 // pred_check_branch
      %1167 = sbr.rel (0) target = $region57
    $region56: #{vnn_forward.1} parent=1 // pred_region
      _
    $region57: #{vnn_forward.1} parent=1 // pred_fallthru
      _
    %1168 = vsyncpa [#allocation3], 1

</llo_original>
